<compile_context>
chip_gen: v7x
topology: tpu7x:2x2x1
jax: 0.10.0
libtpu: 0.0.40
codegen_flags: <defaults>
</compile_context>

<pallas_src>
import functools

import jax
import jax.numpy as jnp
from jax import lax
from jax.experimental import pallas as pl
from jax.experimental.pallas import tpu as pltpu

LEAK = 0.1  # LeakyReLU negative slope used throughout the module


def _leaky(x):
    return jnp.where(x > 0, x, LEAK * x)


# --------------------------------------------------------------------------
# Fused kernel: dynamic depthwise conv + LeakyReLU + conv1 + bias + residual
# --------------------------------------------------------------------------
def fused_dcrb_kernel(xpad_ref, dynk_ref, w1_ref, b1_ref, mask_ref,
                      out_ref, ypad_sc, *, K, H, W, C, P):
    """One batch element per grid step; all intermediates stay in VMEM.

    Wide-flat convention: a padded image (C, Hp, Wp) is stored as (C, Hp*Wp);
    output position (h, w) lives at flat lane p = h*Wp + w.  Lanes with
    (p % Wp) >= W are "ghost" columns (garbage) that get masked / stripped.
    """
    Wp = W + 2 * P
    L = (H - 1) * Wp + W           # wide-flat output length (ghost cols incl.)
    base = P * Wp + P              # flat offset of (h=0, w=0) in the padded image

    xp = xpad_ref[0]               # (C, Hp*Wp)  zero-padded x, flattened
    dk = dynk_ref[0]               # (C, K*K)    per-(b, c) dynamic kernels

    # ---- stage 1: dynamic depthwise conv + LeakyReLU (VPU, lane-dense) ------
    acc = jnp.zeros((C, L), jnp.float32)
    for ki in range(K):
        for kj in range(K):
            off = ki * Wp + kj
            w_col = dk[:, ki * K + kj:ki * K + kj + 1]      # (C, 1)
            acc = acc + xp[:, off:off + L] * w_col
    y = _leaky(acc) * mask_ref[...]                          # ghost cols -> 0

    # ---- zero-padded y lives only in VMEM scratch ----------------------------
    ypad_sc[...] = jnp.zeros_like(ypad_sc)
    ypad_sc[:, base:base + L] = y

    # ---- stage 2: conv1 as K*K accumulated MXU matmuls (lanes = spatial) -----
    out = jnp.zeros((C, L), jnp.float32)
    for ki in range(K):
        for kj in range(K):
            off = ki * Wp + kj
            ysh = ypad_sc[:, off:off + L]                    # (C_in, L)
            wkk = w1_ref[ki * K + kj]                        # (C_out, C_in)
            out = out + jnp.dot(wkk, ysh,
                                preferred_element_type=jnp.float32)

    # ---- bias + residual, single lane-dense store -----------------------------
    xres = xp[:, base:base + L]                              # original x, wide-flat
    out_ref[0] = out + b1_ref[...] + xres


# --------------------------------------------------------------------------
# Full IDR_DCRB forward (public API: NCHW feature map + (B, C) degradation)
# --------------------------------------------------------------------------
def idr_dcrb_forward(x_feat_nchw, x_deg, params):
    B, C, H, W = x_feat_nchw.shape
    K = params["k"]
    assert K % 2 == 1, "only odd kernel sizes supported"
    # TODO(synk): even K needs distinct da_conv1 ((K-1)//2) vs conv1 (K//2) padding.
    P = (K - 1) // 2
    Hp, Wp = H + 2 * P, W + 2 * P
    L = (H - 1) * Wp + W

    x32 = x_feat_nchw.astype(jnp.float32)

    # 1) kernel-generating MLP: tiny matmuls -> plain XLA (no pallas_call)
    h = _leaky(x_deg.astype(jnp.float32) @ params["wa"].T)
    dynk = (h @ params["wb"].T).reshape(B, C, K * K)         # [b, c, ki*K+kj]

    # 2) layout prep (cheap XLA): pad + flatten spatial, reshape weights
    xpad = jnp.pad(x32, ((0, 0), (0, 0), (P, P), (P, P))).reshape(B, C, Hp * Wp)
    mask = ((jnp.arange(L) % Wp) < W).astype(jnp.float32).reshape(1, L)
    w1kk = jnp.transpose(params["w1"], (2, 3, 0, 1)).reshape(K * K, C, C)
    b1 = params["b1"].reshape(C, 1).astype(jnp.float32)

    flops = 2 * B * H * W * C * K * K * (1 + C)
    bytes_accessed = 4 * (xpad.size + dynk.size + w1kk.size + b1.size
                          + mask.size + B * C * L)

    kern = functools.partial(fused_dcrb_kernel, K=K, H=H, W=W, C=C, P=P)
    out_wide = pl.pallas_call(
        kern,
        out_shape=jax.ShapeDtypeStruct((B, C, L), jnp.float32),
        grid=(B,),
        in_specs=[
            pl.BlockSpec((1, C, Hp * Wp), lambda b: (b, 0, 0)),   # padded x
            pl.BlockSpec((1, C, K * K), lambda b: (b, 0, 0)),     # dynamic kernels
            pl.BlockSpec((K * K, C, C), lambda b: (0, 0, 0)),     # conv1 weights
            pl.BlockSpec((C, 1), lambda b: (0, 0)),               # conv1 bias
            pl.BlockSpec((1, L), lambda b: (0, 0)),               # ghost-col mask
        ],
        out_specs=pl.BlockSpec((1, C, L), lambda b: (b, 0, 0)),
        scratch_shapes=[pltpu.VMEM((C, Hp * Wp), jnp.float32)],   # zero-padded y
        compiler_params=pltpu.CompilerParams(
            dimension_semantics=("parallel",),
            vmem_limit_bytes=32 * 1024 * 1024,
        ),
        cost_estimate=pl.CostEstimate(
            flops=flops, transcendentals=0, bytes_accessed=bytes_accessed),
    )(xpad, dynk, w1kk, b1, mask)

    # 3) strip ghost columns: wide-flat (B, C, L) -> (B, C, H, W). Already NCHW.
    out_full = jnp.pad(out_wide, ((0, 0), (0, 0), (0, H * Wp - L)))
    return out_full.reshape(B, C, H, Wp)[:, :, :, :W]


# --------------------------------------------------------------------------
# Pure-JAX reference (mirrors the PyTorch module exactly)
# --------------------------------------------------------------------------
def idr_dcrb_reference(x_feat, x_deg, params):
    B, C, H, W = x_feat.shape
    K = params["k"]
    P1 = (K - 1) // 2
    P2 = K // 2

    h = x_deg @ params["wa"].T
    h = _leaky(h)
    kern = (h @ params["wb"].T).reshape(B * C, 1, K, K)

    out = lax.conv_general_dilated(
        x_feat.reshape(1, B * C, H, W), kern, (1, 1),
        [(P1, P1), (P1, P1)], feature_group_count=B * C,
        dimension_numbers=("NCHW", "OIHW", "NCHW"))
    out = out.reshape(B, C, H, W)
    out = _leaky(out)

    out = lax.conv_general_dilated(
        out, params["w1"], (1, 1), [(P2, P2), (P2, P2)],
        dimension_numbers=("NCHW", "OIHW", "NCHW"))
    out = out + params["b1"][None, :, None, None]
    return out + x_feat


# --------------------------------------------------------------------------
if __name__ == "__main__":
    B, C, H, W, K = 2, 16, 16, 16, 3   # n_feat=16, kernel_size=3

    key = jax.random.PRNGKey(0)
    k1, k2, k3, k4, k5, k6, _ = jax.random.split(key, 7)

    x_feat = jax.random.normal(k1, (B, C, H, W), jnp.float32)
    x_deg = jax.random.normal(k2, (B, C), jnp.float32)

    params = {
        "k": K,
        # IDR_DDC.kernel : Linear(C, C, bias=False) -> LeakyReLU -> Linear(C, C*K*K, bias=False)
        "wa": 0.1 * jax.random.normal(k3, (C, C), jnp.float32),
        "wb": 0.05 * jax.random.normal(k4, (C * K * K, C), jnp.float32),
        # conv1 : default_conv(C, C, K)  (bias=True, padding=K//2)
        "w1": 0.05 * jax.random.normal(k5, (C, C, K, K), jnp.float32),
        "b1": 0.1 * jax.random.normal(k6, (C,), jnp.float32),
    }

    out = idr_dcrb_forward(x_feat, x_deg, params)
    out = jax.block_until_ready(out)

    ref = idr_dcrb_reference(x_feat, x_deg, params)
    assert out.shape == ref.shape == (B, C, H, W)
    assert jnp.allclose(out, ref, rtol=1e-4, atol=1e-4), (
        float(jnp.max(jnp.abs(out - ref))))

    print("KERNEL_OK")
</pallas_src>

<mosaic_0001>
module attributes {stable_mosaic.version = 11 : i64} {
  func.func @fused_dcrb_kernel(%arg0: i32, %arg1: memref<1x16x324xf32, #tpu.memory_space<vmem>>, %arg2: memref<1x16x9xf32, #tpu.memory_space<vmem>>, %arg3: memref<9x16x16xf32, #tpu.memory_space<vmem>>, %arg4: memref<16x1xf32, #tpu.memory_space<vmem>>, %arg5: memref<1x286xf32, #tpu.memory_space<vmem>>, %arg6: memref<1x16x286xf32, #tpu.memory_space<vmem>>, %arg7: memref<16x324xf32, #tpu.memory_space<vmem>>) attributes {dimension_semantics = [#tpu.dimension_semantics<parallel>], iteration_bounds = array<i64: 2>, scalar_prefetch = 0 : i64, scratch_operands = 1 : i64, tpu.core_type = #tpu.core_type<tc>, window_params = [{transform_indices = @transform_0, window_bounds = array<i64: 1, 16, 324>}, {transform_indices = @transform_1, window_bounds = array<i64: 1, 16, 9>}, {pipeline_mode = #tpu.pipeline_mode<synchronous>, transform_indices = @transform_2, window_bounds = array<i64: 9, 16, 16>}, {pipeline_mode = #tpu.pipeline_mode<synchronous>, transform_indices = @transform_3, window_bounds = array<i64: 16, 1>}, {pipeline_mode = #tpu.pipeline_mode<synchronous>, transform_indices = @transform_4, window_bounds = array<i64: 1, 286>}, {transform_indices = @transform_5, window_bounds = array<i64: 1, 16, 286>}]} {
    %c0 = arith.constant 0 : index
    %c0_0 = arith.constant 0 : index
    %c0_1 = arith.constant 0 : index
    %0 = vector.load %arg1[%c0, %c0_0, %c0_1] : memref<1x16x324xf32, #tpu.memory_space<vmem>>, vector<1x16x324xf32>
    %1 = vector.shape_cast %0 : vector<1x16x324xf32> to vector<16x324xf32>
    %c0_2 = arith.constant 0 : index
    %c0_3 = arith.constant 0 : index
    %c0_4 = arith.constant 0 : index
    %2 = vector.load %arg2[%c0_2, %c0_3, %c0_4] : memref<1x16x9xf32, #tpu.memory_space<vmem>>, vector<1x16x9xf32>
    %3 = vector.shape_cast %2 : vector<1x16x9xf32> to vector<16x9xf32>
    %cst = arith.constant 0.000000e+00 : f32
    %4 = vector.broadcast %cst : f32 to vector<16x286xf32>
    %5 = vector.extract_strided_slice %3 {offsets = [0, 0], sizes = [16, 1], strides = [1, 1]} : vector<16x9xf32> to vector<16x1xf32>
    %6 = vector.extract_strided_slice %1 {offsets = [0, 0], sizes = [16, 286], strides = [1, 1]} : vector<16x324xf32> to vector<16x286xf32>
    %7 = vector.broadcast %5 : vector<16x1xf32> to vector<16x286xf32>
    %8 = arith.mulf %6, %7 : vector<16x286xf32>
    %9 = arith.addf %4, %8 : vector<16x286xf32>
    %10 = vector.extract_strided_slice %3 {offsets = [0, 1], sizes = [16, 1], strides = [1, 1]} : vector<16x9xf32> to vector<16x1xf32>
    %11 = vector.extract_strided_slice %1 {offsets = [0, 1], sizes = [16, 286], strides = [1, 1]} : vector<16x324xf32> to vector<16x286xf32>
    %12 = vector.broadcast %10 : vector<16x1xf32> to vector<16x286xf32>
    %13 = arith.mulf %11, %12 : vector<16x286xf32>
    %14 = arith.addf %9, %13 : vector<16x286xf32>
    %15 = vector.extract_strided_slice %3 {offsets = [0, 2], sizes = [16, 1], strides = [1, 1]} : vector<16x9xf32> to vector<16x1xf32>
    %16 = vector.extract_strided_slice %1 {offsets = [0, 2], sizes = [16, 286], strides = [1, 1]} : vector<16x324xf32> to vector<16x286xf32>
    %17 = vector.broadcast %15 : vector<16x1xf32> to vector<16x286xf32>
    %18 = arith.mulf %16, %17 : vector<16x286xf32>
    %19 = arith.addf %14, %18 : vector<16x286xf32>
    %20 = vector.extract_strided_slice %3 {offsets = [0, 3], sizes = [16, 1], strides = [1, 1]} : vector<16x9xf32> to vector<16x1xf32>
    %21 = vector.extract_strided_slice %1 {offsets = [0, 18], sizes = [16, 286], strides = [1, 1]} : vector<16x324xf32> to vector<16x286xf32>
    %22 = vector.broadcast %20 : vector<16x1xf32> to vector<16x286xf32>
    %23 = arith.mulf %21, %22 : vector<16x286xf32>
    %24 = arith.addf %19, %23 : vector<16x286xf32>
    %25 = vector.extract_strided_slice %3 {offsets = [0, 4], sizes = [16, 1], strides = [1, 1]} : vector<16x9xf32> to vector<16x1xf32>
    %26 = vector.extract_strided_slice %1 {offsets = [0, 19], sizes = [16, 286], strides = [1, 1]} : vector<16x324xf32> to vector<16x286xf32>
    %27 = vector.broadcast %25 : vector<16x1xf32> to vector<16x286xf32>
    %28 = arith.mulf %26, %27 : vector<16x286xf32>
    %29 = arith.addf %24, %28 : vector<16x286xf32>
    %30 = vector.extract_strided_slice %3 {offsets = [0, 5], sizes = [16, 1], strides = [1, 1]} : vector<16x9xf32> to vector<16x1xf32>
    %31 = vector.extract_strided_slice %1 {offsets = [0, 20], sizes = [16, 286], strides = [1, 1]} : vector<16x324xf32> to vector<16x286xf32>
    %32 = vector.broadcast %30 : vector<16x1xf32> to vector<16x286xf32>
    %33 = arith.mulf %31, %32 : vector<16x286xf32>
    %34 = arith.addf %29, %33 : vector<16x286xf32>
    %35 = vector.extract_strided_slice %3 {offsets = [0, 6], sizes = [16, 1], strides = [1, 1]} : vector<16x9xf32> to vector<16x1xf32>
    %36 = vector.extract_strided_slice %1 {offsets = [0, 36], sizes = [16, 286], strides = [1, 1]} : vector<16x324xf32> to vector<16x286xf32>
    %37 = vector.broadcast %35 : vector<16x1xf32> to vector<16x286xf32>
    %38 = arith.mulf %36, %37 : vector<16x286xf32>
    %39 = arith.addf %34, %38 : vector<16x286xf32>
    %40 = vector.extract_strided_slice %3 {offsets = [0, 7], sizes = [16, 1], strides = [1, 1]} : vector<16x9xf32> to vector<16x1xf32>
    %41 = vector.extract_strided_slice %1 {offsets = [0, 37], sizes = [16, 286], strides = [1, 1]} : vector<16x324xf32> to vector<16x286xf32>
    %42 = vector.broadcast %40 : vector<16x1xf32> to vector<16x286xf32>
    %43 = arith.mulf %41, %42 : vector<16x286xf32>
    %44 = arith.addf %39, %43 : vector<16x286xf32>
    %45 = vector.extract_strided_slice %3 {offsets = [0, 8], sizes = [16, 1], strides = [1, 1]} : vector<16x9xf32> to vector<16x1xf32>
    %46 = vector.extract_strided_slice %1 {offsets = [0, 38], sizes = [16, 286], strides = [1, 1]} : vector<16x324xf32> to vector<16x286xf32>
    %47 = vector.broadcast %45 : vector<16x1xf32> to vector<16x286xf32>
    %48 = arith.mulf %46, %47 : vector<16x286xf32>
    %49 = arith.addf %44, %48 : vector<16x286xf32>
    %cst_5 = arith.constant 0.000000e+00 : f32
    %50 = vector.broadcast %cst_5 : f32 to vector<16x286xf32>
    %51 = arith.cmpf ogt, %49, %50 : vector<16x286xf32>
    %cst_6 = arith.constant 1.000000e-01 : f32
    %52 = vector.broadcast %cst_6 : f32 to vector<16x286xf32>
    %53 = arith.mulf %52, %49 : vector<16x286xf32>
    %54 = arith.select %51, %49, %53 : vector<16x286xi1>, vector<16x286xf32>
    %c0_7 = arith.constant 0 : index
    %c0_8 = arith.constant 0 : index
    %55 = vector.load %arg5[%c0_7, %c0_8] : memref<1x286xf32, #tpu.memory_space<vmem>>, vector<1x286xf32>
    %56 = vector.broadcast %55 : vector<1x286xf32> to vector<16x286xf32>
    %57 = arith.mulf %54, %56 : vector<16x286xf32>
    %cst_9 = arith.constant 0.000000e+00 : f32
    %58 = vector.broadcast %cst_9 : f32 to vector<16x324xf32>
    %c0_10 = arith.constant 0 : index
    %c0_11 = arith.constant 0 : index
    %59 = vector.load %arg7[%c0_10, %c0_11] : memref<16x324xf32, #tpu.memory_space<vmem>>, vector<16x324xf32>
    tpu.vector_store %arg7[%c0_10, %c0_11], %58 {strides = array<i32>} : memref<16x324xf32, #tpu.memory_space<vmem>>, vector<16x324xf32>,
    %c0_12 = arith.constant 0 : index
    %c19 = arith.constant 19 : index
    %60 = vector.load %arg7[%c0_12, %c19] : memref<16x324xf32, #tpu.memory_space<vmem>>, vector<16x286xf32>
    tpu.vector_store %arg7[%c0_12, %c19], %57 {strides = array<i32>} : memref<16x324xf32, #tpu.memory_space<vmem>>, vector<16x286xf32>,
    %cst_13 = arith.constant 0.000000e+00 : f32
    %61 = vector.broadcast %cst_13 : f32 to vector<16x286xf32>
    %c0_14 = arith.constant 0 : index
    %c0_15 = arith.constant 0 : index
    %62 = vector.load %arg7[%c0_14, %c0_15] : memref<16x324xf32, #tpu.memory_space<vmem>>, vector<16x286xf32>
    %c0_16 = arith.constant 0 : index
    %c0_17 = arith.constant 0 : index
    %c0_18 = arith.constant 0 : index
    %63 = vector.load %arg3[%c0_16, %c0_17, %c0_18] : memref<9x16x16xf32, #tpu.memory_space<vmem>>, vector<1x16x16xf32>
    %64 = vector.shape_cast %63 : vector<1x16x16xf32> to vector<16x16xf32>
    %cst_19 = arith.constant dense<0.000000e+00> : vector<16x286xf32>
    %65 = tpu.matmul %64, %62, %cst_19 {dimension_numbers = #tpu.dot_dimension_numbers<[1], [0], [0], [1], [0, 0, 1, 1], [], []>} : vector<16x16xf32>, vector<16x286xf32>, vector<16x286xf32> -> vector<16x286xf32>
    %66 = arith.addf %61, %65 : vector<16x286xf32>
    %c0_20 = arith.constant 0 : index
    %c1 = arith.constant 1 : index
    %67 = vector.load %arg7[%c0_20, %c1] : memref<16x324xf32, #tpu.memory_space<vmem>>, vector<16x286xf32>
    %c1_21 = arith.constant 1 : index
    %c0_22 = arith.constant 0 : index
    %c0_23 = arith.constant 0 : index
    %68 = vector.load %arg3[%c1_21, %c0_22, %c0_23] : memref<9x16x16xf32, #tpu.memory_space<vmem>>, vector<1x16x16xf32>
    %69 = vector.shape_cast %68 : vector<1x16x16xf32> to vector<16x16xf32>
    %cst_24 = arith.constant dense<0.000000e+00> : vector<16x286xf32>
    %70 = tpu.matmul %69, %67, %cst_24 {dimension_numbers = #tpu.dot_dimension_numbers<[1], [0], [0], [1], [0, 0, 1, 1], [], []>} : vector<16x16xf32>, vector<16x286xf32>, vector<16x286xf32> -> vector<16x286xf32>
    %71 = arith.addf %66, %70 : vector<16x286xf32>
    %c0_25 = arith.constant 0 : index
    %c2 = arith.constant 2 : index
    %72 = vector.load %arg7[%c0_25, %c2] : memref<16x324xf32, #tpu.memory_space<vmem>>, vector<16x286xf32>
    %c2_26 = arith.constant 2 : index
    %c0_27 = arith.constant 0 : index
    %c0_28 = arith.constant 0 : index
    %73 = vector.load %arg3[%c2_26, %c0_27, %c0_28] : memref<9x16x16xf32, #tpu.memory_space<vmem>>, vector<1x16x16xf32>
    %74 = vector.shape_cast %73 : vector<1x16x16xf32> to vector<16x16xf32>
    %cst_29 = arith.constant dense<0.000000e+00> : vector<16x286xf32>
    %75 = tpu.matmul %74, %72, %cst_29 {dimension_numbers = #tpu.dot_dimension_numbers<[1], [0], [0], [1], [0, 0, 1, 1], [], []>} : vector<16x16xf32>, vector<16x286xf32>, vector<16x286xf32> -> vector<16x286xf32>
    %76 = arith.addf %71, %75 : vector<16x286xf32>
    %c0_30 = arith.constant 0 : index
    %c18 = arith.constant 18 : index
    %77 = vector.load %arg7[%c0_30, %c18] : memref<16x324xf32, #tpu.memory_space<vmem>>, vector<16x286xf32>
    %c3 = arith.constant 3 : index
    %c0_31 = arith.constant 0 : index
    %c0_32 = arith.constant 0 : index
    %78 = vector.load %arg3[%c3, %c0_31, %c0_32] : memref<9x16x16xf32, #tpu.memory_space<vmem>>, vector<1x16x16xf32>
    %79 = vector.shape_cast %78 : vector<1x16x16xf32> to vector<16x16xf32>
    %cst_33 = arith.constant dense<0.000000e+00> : vector<16x286xf32>
    %80 = tpu.matmul %79, %77, %cst_33 {dimension_numbers = #tpu.dot_dimension_numbers<[1], [0], [0], [1], [0, 0, 1, 1], [], []>} : vector<16x16xf32>, vector<16x286xf32>, vector<16x286xf32> -> vector<16x286xf32>
    %81 = arith.addf %76, %80 : vector<16x286xf32>
    %c0_34 = arith.constant 0 : index
    %c19_35 = arith.constant 19 : index
    %82 = vector.load %arg7[%c0_34, %c19_35] : memref<16x324xf32, #tpu.memory_space<vmem>>, vector<16x286xf32>
    %c4 = arith.constant 4 : index
    %c0_36 = arith.constant 0 : index
    %c0_37 = arith.constant 0 : index
    %83 = vector.load %arg3[%c4, %c0_36, %c0_37] : memref<9x16x16xf32, #tpu.memory_space<vmem>>, vector<1x16x16xf32>
    %84 = vector.shape_cast %83 : vector<1x16x16xf32> to vector<16x16xf32>
    %cst_38 = arith.constant dense<0.000000e+00> : vector<16x286xf32>
    %85 = tpu.matmul %84, %82, %cst_38 {dimension_numbers = #tpu.dot_dimension_numbers<[1], [0], [0], [1], [0, 0, 1, 1], [], []>} : vector<16x16xf32>, vector<16x286xf32>, vector<16x286xf32> -> vector<16x286xf32>
    %86 = arith.addf %81, %85 : vector<16x286xf32>
    %c0_39 = arith.constant 0 : index
    %c20 = arith.constant 20 : index
    %87 = vector.load %arg7[%c0_39, %c20] : memref<16x324xf32, #tpu.memory_space<vmem>>, vector<16x286xf32>
    %c5 = arith.constant 5 : index
    %c0_40 = arith.constant 0 : index
    %c0_41 = arith.constant 0 : index
    %88 = vector.load %arg3[%c5, %c0_40, %c0_41] : memref<9x16x16xf32, #tpu.memory_space<vmem>>, vector<1x16x16xf32>
    %89 = vector.shape_cast %88 : vector<1x16x16xf32> to vector<16x16xf32>
    %cst_42 = arith.constant dense<0.000000e+00> : vector<16x286xf32>
    %90 = tpu.matmul %89, %87, %cst_42 {dimension_numbers = #tpu.dot_dimension_numbers<[1], [0], [0], [1], [0, 0, 1, 1], [], []>} : vector<16x16xf32>, vector<16x286xf32>, vector<16x286xf32> -> vector<16x286xf32>
    %91 = arith.addf %86, %90 : vector<16x286xf32>
    %c0_43 = arith.constant 0 : index
    %c36 = arith.constant 36 : index
    %92 = vector.load %arg7[%c0_43, %c36] : memref<16x324xf32, #tpu.memory_space<vmem>>, vector<16x286xf32>
    %c6 = arith.constant 6 : index
    %c0_44 = arith.constant 0 : index
    %c0_45 = arith.constant 0 : index
    %93 = vector.load %arg3[%c6, %c0_44, %c0_45] : memref<9x16x16xf32, #tpu.memory_space<vmem>>, vector<1x16x16xf32>
    %94 = vector.shape_cast %93 : vector<1x16x16xf32> to vector<16x16xf32>
    %cst_46 = arith.constant dense<0.000000e+00> : vector<16x286xf32>
    %95 = tpu.matmul %94, %92, %cst_46 {dimension_numbers = #tpu.dot_dimension_numbers<[1], [0], [0], [1], [0, 0, 1, 1], [], []>} : vector<16x16xf32>, vector<16x286xf32>, vector<16x286xf32> -> vector<16x286xf32>
    %96 = arith.addf %91, %95 : vector<16x286xf32>
    %c0_47 = arith.constant 0 : index
    %c37 = arith.constant 37 : index
    %97 = vector.load %arg7[%c0_47, %c37] : memref<16x324xf32, #tpu.memory_space<vmem>>, vector<16x286xf32>
    %c7 = arith.constant 7 : index
    %c0_48 = arith.constant 0 : index
    %c0_49 = arith.constant 0 : index
    %98 = vector.load %arg3[%c7, %c0_48, %c0_49] : memref<9x16x16xf32, #tpu.memory_space<vmem>>, vector<1x16x16xf32>
    %99 = vector.shape_cast %98 : vector<1x16x16xf32> to vector<16x16xf32>
    %cst_50 = arith.constant dense<0.000000e+00> : vector<16x286xf32>
    %100 = tpu.matmul %99, %97, %cst_50 {dimension_numbers = #tpu.dot_dimension_numbers<[1], [0], [0], [1], [0, 0, 1, 1], [], []>} : vector<16x16xf32>, vector<16x286xf32>, vector<16x286xf32> -> vector<16x286xf32>
    %101 = arith.addf %96, %100 : vector<16x286xf32>
    %c0_51 = arith.constant 0 : index
    %c38 = arith.constant 38 : index
    %102 = vector.load %arg7[%c0_51, %c38] : memref<16x324xf32, #tpu.memory_space<vmem>>, vector<16x286xf32>
    %c8 = arith.constant 8 : index
    %c0_52 = arith.constant 0 : index
    %c0_53 = arith.constant 0 : index
    %103 = vector.load %arg3[%c8, %c0_52, %c0_53] : memref<9x16x16xf32, #tpu.memory_space<vmem>>, vector<1x16x16xf32>
    %104 = vector.shape_cast %103 : vector<1x16x16xf32> to vector<16x16xf32>
    %cst_54 = arith.constant dense<0.000000e+00> : vector<16x286xf32>
    %105 = tpu.matmul %104, %102, %cst_54 {dimension_numbers = #tpu.dot_dimension_numbers<[1], [0], [0], [1], [0, 0, 1, 1], [], []>} : vector<16x16xf32>, vector<16x286xf32>, vector<16x286xf32> -> vector<16x286xf32>
    %106 = arith.addf %101, %105 : vector<16x286xf32>
    %107 = vector.extract_strided_slice %1 {offsets = [0, 19], sizes = [16, 286], strides = [1, 1]} : vector<16x324xf32> to vector<16x286xf32>
    %c0_55 = arith.constant 0 : index
    %c0_56 = arith.constant 0 : index
    %108 = vector.load %arg4[%c0_55, %c0_56] : memref<16x1xf32, #tpu.memory_space<vmem>>, vector<16x1xf32>
    %109 = vector.broadcast %108 : vector<16x1xf32> to vector<16x286xf32>
    %110 = arith.addf %106, %109 : vector<16x286xf32>
    %111 = arith.addf %110, %107 : vector<16x286xf32>
    %c0_57 = arith.constant 0 : index
    %c0_58 = arith.constant 0 : index
    %c0_59 = arith.constant 0 : index
    %112 = vector.load %arg6[%c0_57, %c0_58, %c0_59] : memref<1x16x286xf32, #tpu.memory_space<vmem>>, vector<1x16x286xf32>
    %113 = vector.shape_cast %112 : vector<1x16x286xf32> to vector<16x286xf32>
    %114 = vector.shape_cast %111 : vector<16x286xf32> to vector<1x16x286xf32>
    tpu.vector_store %arg6[%c0_57, %c0_58, %c0_59], %114 {strides = array<i32>} : memref<1x16x286xf32, #tpu.memory_space<vmem>>, vector<1x16x286xf32>,
    return
  }
  func.func @transform_0(%arg0: i32) -> (i32, i32, i32) {
    %c0_i32 = arith.constant 0 : i32
    %c0_i32_0 = arith.constant 0 : i32
    %c0_i32_1 = arith.constant 0 : i32
    return %arg0, %c0_i32, %c0_i32_0 : i32, i32, i32
  }
  func.func @transform_1(%arg0: i32) -> (i32, i32, i32) {
    %c0_i32 = arith.constant 0 : i32
    %c0_i32_0 = arith.constant 0 : i32
    %c0_i32_1 = arith.constant 0 : i32
    return %arg0, %c0_i32, %c0_i32_0 : i32, i32, i32
  }
  func.func @transform_2(%arg0: i32) -> (i32, i32, i32) {
    %c0_i32 = arith.constant 0 : i32
    %c0_i32_0 = arith.constant 0 : i32
    %c0_i32_1 = arith.constant 0 : i32
    %c0_i32_2 = arith.constant 0 : i32
    return %c0_i32, %c0_i32_0, %c0_i32_1 : i32, i32, i32
  }
  func.func @transform_3(%arg0: i32) -> (i32, i32) {
    %c0_i32 = arith.constant 0 : i32
    %c0_i32_0 = arith.constant 0 : i32
    %c0_i32_1 = arith.constant 0 : i32
    return %c0_i32, %c0_i32_0 : i32, i32
  }
  func.func @transform_4(%arg0: i32) -> (i32, i32) {
    %c0_i32 = arith.constant 0 : i32
    %c0_i32_0 = arith.constant 0 : i32
    %c0_i32_1 = arith.constant 0 : i32
    return %c0_i32, %c0_i32_0 : i32, i32
  }
  func.func @transform_5(%arg0: i32) -> (i32, i32, i32) {
    %c0_i32 = arith.constant 0 : i32
    %c0_i32_0 = arith.constant 0 : i32
    %c0_i32_1 = arith.constant 0 : i32
    return %arg0, %c0_i32, %c0_i32_0 : i32, i32, i32
  }
}

</mosaic_0001>

<llo_original>
// kernel: tpu_custom_call.1
$region0: #{tpu_custom_call.1}
  #allocation0 [shape = 'u32[]', space=smem, size = 0x4, offset = 0x4, fixed_abs, tag = 'smem constant byte address 0x4 - core index']
  #allocation1 [shape = 'u32[144,128]{1,0:T(1,128)}', space=vmem, size = 0x12000, scoped, tag = 'internal scratch']
  #allocation2 [shape = 'f32[16,324]{1,0:T(8,128)}', space=vmem, size = 0x6000, scoped, tag = 'scratch operand']
  %s0 = inlined_call_operand.hbm [shape: f32[2,16,324], index: 0, kind: input, shape index: {}]
  %s1 = inlined_call_operand.vmem [shape: f32[2,16,9], index: 1, kind: input, shape index: {}]
  %s2 = inlined_call_operand.hbm [shape: f32[9,16,16], index: 2, kind: input, shape index: {}]
  %s3 = inlined_call_operand.vmem [shape: f32[16,1], index: 3, kind: input, shape index: {}]
  %s4 = inlined_call_operand.vmem [shape: f32[1,286], index: 4, kind: input, shape index: {}]
  %s5 = inlined_call_operand.hbm [shape: f32[2,16,286], index: 5, kind: output, shape index: {}]
  %s6 = sld [smem:[#allocation0]]
  $region61: #{tpu_custom_call.1} parent=0
    _
  %s8 = ssub.s32 1, %s6
  %s9 = scalar_select 0, %s8, %s6
  $region1: #{tpu_custom_call.1} parent=0
    #allocation3 [shape = 'u8[49152]{0}', space=vmem, size = 0xc000, scoped, tag = 'input window, operand 0']
    #allocation4 [shape = 's32[2]{0}', space=sflag, size = 0x8, scoped, tag = 'scoped memory for tpu_custom_call.1']
    #allocation5 [shape = 's32[2]{0}', space=sflag, size = 0x8, scoped, tag = 'scoped memory for tpu_custom_call.1']
    #allocation6 [shape = 'u8[73728]{0}', space=vmem, size = 0x12000, scoped, tag = 'input window, operand 2, single buffered']
    #allocation7 [shape = 's32[1]{0}', space=sflag, size = 0x4, scoped, tag = 'scoped memory for tpu_custom_call.1']
    #allocation8 [shape = 'u8[49152]{0}', space=vmem, size = 0xc000, scoped, tag = 'output window, operand 0']
    %10 = vsyncpa [#allocation4], 0
    %s11 = scalar_lea.sflag [#allocation4], 1
    %12 = vsyncpa %s11, 0
    %13 = vsyncpa [#allocation7], 0
    %14 = vsyncpa [#allocation5], 0
    %s15 = scalar_lea.sflag [#allocation5], 1
    %16 = vsyncpa %s15, 0
    loop: start=0, step=1, limit=4
    $region2: #{tpu_custom_call.1} parent=1 // loop_pre_header
      _
    $region3: #{tpu_custom_call.1} parent=1 // loop_header
      %s18 = sphi 0, %s22
      %p19 = scmp.ge.s32.totalorder %s18, 4
      %s28 = sphi 0, %s30
      %s31 = sphi 0, %s28
      %s32 = sphi 0, %s31
      %s48 = sphi 0, %s32
      %s54 = sphi 0, %s56
      %s57 = sphi 0, %s54
      %s58 = sphi 0, %s57
      %s74 = sphi 0, %s58
      %s78 = sphi 0, %s78
      %s80 = sphi 0, %s78
      %s81 = sphi 0, %s80
      %s95 = sphi 0, %s81
      %s99 = sphi 0, %s99
      %s101 = sphi 0, %s99
      %s102 = sphi 0, %s101
      %s116 = sphi 0, %s102
      %s120 = sphi 0, %s120
      %s122 = sphi 0, %s120
      %s123 = sphi 0, %s122
      %s137 = sphi 0, %s123
      %s143 = sphi 0, %s145
      %s146 = sphi 0, %s143
      %s147 = sphi 0, %s146
      %s163 = sphi 0, %s147
    $region4: #{tpu_custom_call.1} parent=1 // loop_header_branch
      %21 = sbr.rel (%p19) target = $region8
    $region5: #{tpu_custom_call.1} parent=1 // loop_body
      %s23 = ssub.s32 %s18, 1
      %s24 = ssub.s32 %s18, 2
      %s25 = sadd.s32 %s18, 1
      %s26 = ssub.s32 %s18, %s25
      %p27 = scmp.eq.s32.totalorder %s26, 0
      %s29 = sadd.s32 %s28, 1
      %s30 = scalar_select %p27, %s28, %s29
      %p33 = pneg %p27
      %p34 = scmp.eq.s32.totalorder %s18, 1
      %p35 = por %p33, %p34
      %p36 = scmp.ne.s32.totalorder %s28, %s31
      %p37 = scmp.eq.s32.totalorder %s18, 0
      %p38 = por %p36, %p37
      %p39 = scmp.ne.s32.totalorder %s28, %s31
      %p40 = scmp.eq.s32.totalorder %s23, 1
      %p41 = por %p39, %p40
      %p42 = scmp.ne.s32.totalorder %s31, %s32
      %p43 = scmp.eq.s32.totalorder %s23, 0
      %p44 = por %p42, %p43
      %p45 = scmp.ne.s32.totalorder %s31, %s32
      %p46 = scmp.eq.s32.totalorder %s24, 1
      %p47 = por %p45, %p46
      %p49 = scmp.ne.s32.totalorder %s32, %s48
      %p50 = scmp.eq.s32.totalorder %s24, 0
      %p51 = por %p49, %p50
      %s52 = ssub.s32 %s18, %s25
      %p53 = scmp.eq.s32.totalorder %s52, 0
      %s55 = sadd.s32 %s54, 1
      %s56 = scalar_select %p53, %s54, %s55
      %p59 = pneg %p53
      %p60 = scmp.eq.s32.totalorder %s18, 1
      %p61 = por %p59, %p60
      %p62 = scmp.ne.s32.totalorder %s54, %s57
      %p63 = scmp.eq.s32.totalorder %s18, 0
      %p64 = por %p62, %p63
      %p65 = scmp.ne.s32.totalorder %s54, %s57
      %p66 = scmp.eq.s32.totalorder %s23, 1
      %p67 = por %p65, %p66
      %p68 = scmp.ne.s32.totalorder %s57, %s58
      %p69 = scmp.eq.s32.totalorder %s23, 0
      %p70 = por %p68, %p69
      %p71 = scmp.ne.s32.totalorder %s57, %s58
      %p72 = scmp.eq.s32.totalorder %s24, 1
      %p73 = por %p71, %p72
      %p75 = scmp.ne.s32.totalorder %s58, %s74
      %p76 = scmp.eq.s32.totalorder %s24, 0
      %p77 = por %p75, %p76
      %s79 = sadd.s32 %s78, 1
      %p82 = scmp.eq.s32.totalorder %s18, 1
      %p83 = scmp.ne.s32.totalorder %s78, %s80
      %p84 = scmp.eq.s32.totalorder %s18, 0
      %p85 = por %p83, %p84
      %p86 = scmp.ne.s32.totalorder %s78, %s80
      %p87 = scmp.eq.s32.totalorder %s23, 1
      %p88 = por %p86, %p87
      %p89 = scmp.ne.s32.totalorder %s80, %s81
      %p90 = scmp.eq.s32.totalorder %s23, 0
      %p91 = por %p89, %p90
      %p92 = scmp.ne.s32.totalorder %s80, %s81
      %p93 = scmp.eq.s32.totalorder %s24, 1
      %p94 = por %p92, %p93
      %p96 = scmp.ne.s32.totalorder %s81, %s95
      %p97 = scmp.eq.s32.totalorder %s24, 0
      %p98 = por %p96, %p97
      %s100 = sadd.s32 %s99, 1
      %p103 = scmp.eq.s32.totalorder %s18, 1
      %p104 = scmp.ne.s32.totalorder %s99, %s101
      %p105 = scmp.eq.s32.totalorder %s18, 0
      %p106 = por %p104, %p105
      %p107 = scmp.ne.s32.totalorder %s99, %s101
      %p108 = scmp.eq.s32.totalorder %s23, 1
      %p109 = por %p107, %p108
      %p110 = scmp.ne.s32.totalorder %s101, %s102
      %p111 = scmp.eq.s32.totalorder %s23, 0
      %p112 = por %p110, %p111
      %p113 = scmp.ne.s32.totalorder %s101, %s102
      %p114 = scmp.eq.s32.totalorder %s24, 1
      %p115 = por %p113, %p114
      %p117 = scmp.ne.s32.totalorder %s102, %s116
      %p118 = scmp.eq.s32.totalorder %s24, 0
      %p119 = por %p117, %p118
      %s121 = sadd.s32 %s120, 1
      %p124 = scmp.eq.s32.totalorder %s18, 1
      %p125 = scmp.ne.s32.totalorder %s120, %s122
      %p126 = scmp.eq.s32.totalorder %s18, 0
      %p127 = por %p125, %p126
      %p128 = scmp.ne.s32.totalorder %s120, %s122
      %p129 = scmp.eq.s32.totalorder %s23, 1
      %p130 = por %p128, %p129
      %p131 = scmp.ne.s32.totalorder %s122, %s123
      %p132 = scmp.eq.s32.totalorder %s23, 0
      %p133 = por %p131, %p132
      %p134 = scmp.ne.s32.totalorder %s122, %s123
      %p135 = scmp.eq.s32.totalorder %s24, 1
      %p136 = por %p134, %p135
      %p138 = scmp.ne.s32.totalorder %s123, %s137
      %p139 = scmp.eq.s32.totalorder %s24, 0
      %p140 = por %p138, %p139
      %s141 = ssub.s32 %s18, %s25
      %p142 = scmp.eq.s32.totalorder %s141, 0
      %s144 = sadd.s32 %s143, 1
      %s145 = scalar_select %p142, %s143, %s144
      %p148 = pneg %p142
      %p149 = scmp.eq.s32.totalorder %s18, 1
      %p150 = por %p148, %p149
      %p151 = scmp.ne.s32.totalorder %s143, %s146
      %p152 = scmp.eq.s32.totalorder %s18, 0
      %p153 = por %p151, %p152
      %p154 = scmp.ne.s32.totalorder %s143, %s146
      %p155 = scmp.eq.s32.totalorder %s23, 1
      %p156 = por %p154, %p155
      %p157 = scmp.ne.s32.totalorder %s146, %s147
      %p158 = scmp.eq.s32.totalorder %s23, 0
      %p159 = por %p157, %p158
      %p160 = scmp.ne.s32.totalorder %s146, %s147
      %p161 = scmp.eq.s32.totalorder %s24, 1
      %p162 = por %p160, %p161
      %p164 = scmp.ne.s32.totalorder %s147, %s163
      %p165 = scmp.eq.s32.totalorder %s24, 0
      %p166 = por %p164, %p165
      %p167 = scmp.le.s32.totalorder 1, %s18
      %p168 = scmp.lt.s32.totalorder %s18, 3
      %p169 = pnand %p167, %p168
      %p170 = pneg %p169
      // Predicated region
      $region9: #{tpu_custom_call.1} parent=5 // pred_check
        _
      $region10: #{tpu_custom_call.1} parent=5 // pred_check_branch
        %172 = sbr.rel (%p169) target = $region12
      $region11: #{tpu_custom_call.1} parent=5 // pred_region
        %s173 = ssub.s32 %s18, 1
        // Predicated region
        $region13: #{tpu_custom_call.1} parent=11 // pred_check
          %p174 = pneg %p91
        $region14: #{tpu_custom_call.1} parent=11 // pred_check_branch
          %176 = sbr.rel (%p174) target = $region16
        $region15: #{tpu_custom_call.1} parent=11 // pred_region
          %s178 = ssub.s32 2304, 2304
          %179 = vsyncadd [#allocation7], %s178
          %s180 = sshll.u32 [#allocation6], 4
          %s181 = int_to_ptr.vmem [resolvable:$true] %s180
          %186 = dma.hbm_to_vmem [thread:$0]  %s2, 2304, %s181, [#allocation7], 128, 128, 8
        $region16: #{tpu_custom_call.1} parent=11 // pred_fallthru
          _
        // Predicated region
        $region17: #{tpu_custom_call.1} parent=11 // pred_check
          %p187 = pneg %p112
        $region18: #{tpu_custom_call.1} parent=11 // pred_check_branch
          %189 = sbr.rel (%p187) target = $region20
        $region19: #{tpu_custom_call.1} parent=11 // pred_region
          _
        $region20: #{tpu_custom_call.1} parent=11 // pred_fallthru
          _
        // Predicated region
        $region21: #{tpu_custom_call.1} parent=11 // pred_check
          %p190 = pneg %p133
        $region22: #{tpu_custom_call.1} parent=11 // pred_check_branch
          %192 = sbr.rel (%p190) target = $region24
        $region23: #{tpu_custom_call.1} parent=11 // pred_region
          _
        $region24: #{tpu_custom_call.1} parent=11 // pred_fallthru
          _
      $region12: #{tpu_custom_call.1} parent=5 // pred_fallthru
        _
      %p193 = scmp.lt.s32.totalorder %s18, 2
      // Predicated region
      $region25: #{tpu_custom_call.1} parent=5 // pred_check
        %p194 = pneg %p193
      $region26: #{tpu_custom_call.1} parent=5 // pred_check_branch
        %196 = sbr.rel (%p194) target = $region28
      $region27: #{tpu_custom_call.1} parent=5 // pred_region
        // Predicated region
        $region29: #{tpu_custom_call.1} parent=27 // pred_check
          %p197 = pneg %p38
        $region30: #{tpu_custom_call.1} parent=27 // pred_check_branch
          %199 = sbr.rel (%p197) target = $region32
        $region31: #{tpu_custom_call.1} parent=27 // pred_region
          %s200 = sand.u32 %s28, 1
          %s201 = scalar_lea.sflag [#allocation4], %s200
          %s202 = sand.u32 %s28, 1
          %s203 = smul.addr %s202, 48
          %s204 = scalar_lea.vmem [#allocation3], %s203
          %s206 = ssub.s32 768, 768
          %207 = vsyncadd %s201, %s206
          %s208 = smul.addr %s18, 6
          %s209 = smul.addr %s208, 128
          %s210 = scalar_lea.hbm %s0, %s209
          %s211 = sshll.u32 %s204, 4
          %s212 = int_to_ptr.vmem [resolvable:$true] %s211
          %217 = dma.hbm_to_vmem [thread:$0]  %s210, 768, %s212, %s201, 384, 384, 24
        $region32: #{tpu_custom_call.1} parent=27 // pred_fallthru
          _
        // Predicated region
        $region33: #{tpu_custom_call.1} parent=27 // pred_check
          %p218 = pneg %p64
        $region34: #{tpu_custom_call.1} parent=27 // pred_check_branch
          %220 = sbr.rel (%p218) target = $region36
        $region35: #{tpu_custom_call.1} parent=27 // pred_region
          %p221 = scmp.lt.s32.totalorder %s18, 1
          %s222 = scalar_select %p221, %s18, 1
          %s223 = smul.addr %s222, 2
          %s224 = smul.addr %s223, 8
          %s225 = scalar_lea.vmem %s1, %s224
        $region36: #{tpu_custom_call.1} parent=27 // pred_fallthru
          _
      $region28: #{tpu_custom_call.1} parent=5 // pred_fallthru
        _
      %p226 = scmp.le.s32.totalorder 1, %s18
      %p227 = scmp.lt.s32.totalorder %s18, 3
      %p228 = pnand %p226, %p227
      %p229 = pneg %p228
      // Predicated region
      $region37: #{tpu_custom_call.1} parent=5 // pred_check
        _
      $region38: #{tpu_custom_call.1} parent=5 // pred_check_branch
        %231 = sbr.rel (%p228) target = $region40
      $region39: #{tpu_custom_call.1} parent=5 // pred_region
        %s232 = ssub.s32 %s18, 1
        %s233 = sand.u32 %s31, 1
        %s234 = scalar_lea.sflag [#allocation4], %s233
        %s235 = sand.u32 %s31, 1
        %s236 = smul.addr %s235, 48
        %s237 = scalar_lea.vmem [#allocation3], %s236
        // Predicated region
        $region41: #{tpu_custom_call.1} parent=39 // pred_check
          %p238 = pneg %p44
        $region42: #{tpu_custom_call.1} parent=39 // pred_check_branch
          %240 = sbr.rel (%p238) target = $region44
        $region43: #{tpu_custom_call.1} parent=39 // pred_region
          %241 = dma.done %s234, 768
        $region44: #{tpu_custom_call.1} parent=39 // pred_fallthru
          _
        // Predicated region
        $region45: #{tpu_custom_call.1} parent=39 // pred_check
          %p242 = pneg %p91
        $region46: #{tpu_custom_call.1} parent=39 // pred_check_branch
          %244 = sbr.rel (%p242) target = $region48
        $region47: #{tpu_custom_call.1} parent=39 // pred_region
          %245 = dma.done [#allocation7], 2304
        $region48: #{tpu_custom_call.1} parent=39 // pred_fallthru
          _
        %s246 = sand.u32 %s31, 1
        %s247 = scalar_lea.sflag [#allocation4], %s246
        %s248 = sand.u32 %s31, 1
        %s249 = smul.addr %s248, 48
        %s250 = scalar_lea.vmem [#allocation3], %s249
        %p251 = pneg %p44
        %p252 = pneg %p41
        %p253 = scmp.lt.s32.totalorder %s23, 1
        %s254 = scalar_select %p253, %s23, 1
        %s255 = smul.addr %s254, 2
        %s256 = smul.addr %s255, 8
        %s257 = scalar_lea.vmem %s1, %s256
        %p258 = pneg %p70
        %p259 = pneg %p67
        %p260 = pneg %p91
        %p261 = pneg %p88
        %p262 = pneg %p112
        %p263 = pneg %p109
        %p264 = pneg %p133
        %p265 = pneg %p130
        %p266 = pneg %p159
        %p267 = pneg %p156
        %s268 = sand.u32 %s146, 1
        %s269 = scalar_lea.sflag [#allocation5], %s268
        %s270 = sand.u32 %s146, 1
        %s271 = smul.addr %s270, 48
        %s272 = scalar_lea.vmem [#allocation8], %s271
        %p273 = scmp.lt.s32.totalorder %s23, 1
        %s274 = scalar_select %p273, %s23, 1
        %s275 = smul.addr %s274, 2
        %s276 = smul.addr %s275, 8
        %s277 = scalar_lea.vmem %s1, %s276
        %v278 = vld [vmem:[%s237] sm:$0xff]
        %v279 = vld [vmem:[%s237 + $0x8] sm:$0xff]
        %v280 = vld [vmem:[%s237 + $0x10] sm:$0xff]
        %v281 = vld [vmem:[%s237 + $0x18] sm:$0xff]
        %v282 = vld [vmem:[%s237 + $0x20] sm:$0xff]
        %v283 = vld [vmem:[%s237 + $0x28] sm:$0xff]
        %v284 = vld [vmem:[%s277] sm:$0xff]
        %v285 = vld [vmem:[%s277 + $0x8] sm:$0xff]
        %287 = vset.pattern.permute.xlu0 0
        %288 = vperm.xlu0 %287, %v284
        %v289 = vpop.permute.xlu0 %288
        %292 = vset.pattern.permute.xlu0 0
        %293 = vperm.xlu0 %292, %v285
        %v294 = vpop.permute.xlu0 %293
        %v296 = vmul.f32 %v278, %v289
        %v297 = vmul.f32 %v279, %v289
        %v298 = vmul.f32 %v280, %v289
        %v299 = vmul.f32 %v281, %v294
        %v300 = vmul.f32 %v282, %v294
        %v301 = vmul.f32 %v283, %v294
        %v302 = vadd.f32 %v296, 0.0
        %v303 = vadd.f32 %v297, 0.0
        %v304 = vadd.f32 %v298, 0.0
        %v305 = vadd.f32 %v299, 0.0
        %v306 = vadd.f32 %v300, 0.0
        %v307 = vadd.f32 %v301, 0.0
        %308 = vset.pattern.permute.xlu0 1
        %309 = vperm.xlu0 %308, %v284
        %v310 = vpop.permute.xlu0 %309
        %312 = vset.pattern.permute.xlu0 1
        %313 = vperm.xlu0 %312, %v285
        %v314 = vpop.permute.xlu0 %313
        %v316 = vmul.f32 %v278, %v310
        %v317 = vmul.f32 %v279, %v310
        %v318 = vmul.f32 %v280, %v310
        %v319 = vmul.f32 %v281, %v314
        %v320 = vmul.f32 %v282, %v314
        %v321 = vmul.f32 %v283, %v314
        %328 = vrot.lane.b32.xlu0 %v316, 127
        %v329 = vpop.permute.xlu0 %328
        %330 = vrot.lane.b32.xlu0 %v317, 127
        %v331 = vpop.permute.xlu0 %330
        %332 = vrot.lane.b32.xlu0 %v318, 127
        %v333 = vpop.permute.xlu0 %332
        %334 = vrot.lane.b32.xlu0 %v319, 127
        %v335 = vpop.permute.xlu0 %334
        %336 = vrot.lane.b32.xlu0 %v320, 127
        %v337 = vpop.permute.xlu0 %336
        %338 = vrot.lane.b32.xlu0 %v321, 127
        %v339 = vpop.permute.xlu0 %338
        %vm340 = vcmask 1039360
        %v341 = vsel %vm340, %v329, %v331
        %v342 = vsel %vm340, %v331, %v333
        %v343 = vsel %vm340, %v335, %v337
        %v344 = vsel %vm340, %v337, %v339
        %v351 = vadd.f32 %v302, %v341
        %v352 = vadd.f32 %v303, %v342
        %v353 = vadd.f32 %v304, %v333
        %v354 = vadd.f32 %v305, %v343
        %v355 = vadd.f32 %v306, %v344
        %v356 = vadd.f32 %v307, %v339
        %357 = vset.pattern.permute.xlu0 2
        %358 = vperm.xlu0 %357, %v284
        %v359 = vpop.permute.xlu0 %358
        %361 = vset.pattern.permute.xlu0 2
        %362 = vperm.xlu0 %361, %v285
        %v363 = vpop.permute.xlu0 %362
        %v365 = vmul.f32 %v278, %v359
        %v366 = vmul.f32 %v279, %v359
        %v367 = vmul.f32 %v280, %v359
        %v368 = vmul.f32 %v281, %v363
        %v369 = vmul.f32 %v282, %v363
        %v370 = vmul.f32 %v283, %v363
        %377 = vrot.lane.b32.xlu0 %v365, 126
        %v378 = vpop.permute.xlu0 %377
        %379 = vrot.lane.b32.xlu0 %v366, 126
        %v380 = vpop.permute.xlu0 %379
        %381 = vrot.lane.b32.xlu0 %v367, 126
        %v382 = vpop.permute.xlu0 %381
        %383 = vrot.lane.b32.xlu0 %v368, 126
        %v384 = vpop.permute.xlu0 %383
        %385 = vrot.lane.b32.xlu0 %v369, 126
        %v386 = vpop.permute.xlu0 %385
        %387 = vrot.lane.b32.xlu0 %v370, 126
        %v388 = vpop.permute.xlu0 %387
        %vm389 = vcmask 1031168
        %v390 = vsel %vm389, %v378, %v380
        %v391 = vsel %vm389, %v380, %v382
        %v392 = vsel %vm389, %v384, %v386
        %v393 = vsel %vm389, %v386, %v388
        %v400 = vadd.f32 %v351, %v390
        %v401 = vadd.f32 %v352, %v391
        %v402 = vadd.f32 %v353, %v382
        %v403 = vadd.f32 %v354, %v392
        %v404 = vadd.f32 %v355, %v393
        %v405 = vadd.f32 %v356, %v388
        %406 = vset.pattern.permute.xlu0 3
        %407 = vperm.xlu0 %406, %v284
        %v408 = vpop.permute.xlu0 %407
        %410 = vset.pattern.permute.xlu0 3
        %411 = vperm.xlu0 %410, %v285
        %v412 = vpop.permute.xlu0 %411
        %v414 = vmul.f32 %v278, %v408
        %v415 = vmul.f32 %v279, %v408
        %v416 = vmul.f32 %v280, %v408
        %v417 = vmul.f32 %v281, %v412
        %v418 = vmul.f32 %v282, %v412
        %v419 = vmul.f32 %v283, %v412
        %426 = vrot.lane.b32.xlu0 %v414, 110
        %v427 = vpop.permute.xlu0 %426
        %428 = vrot.lane.b32.xlu0 %v415, 110
        %v429 = vpop.permute.xlu0 %428
        %430 = vrot.lane.b32.xlu0 %v416, 110
        %v431 = vpop.permute.xlu0 %430
        %432 = vrot.lane.b32.xlu0 %v417, 110
        %v433 = vpop.permute.xlu0 %432
        %434 = vrot.lane.b32.xlu0 %v418, 110
        %v435 = vpop.permute.xlu0 %434
        %436 = vrot.lane.b32.xlu0 %v419, 110
        %v437 = vpop.permute.xlu0 %436
        %vm438 = vcmask 900096
        %v439 = vsel %vm438, %v427, %v429
        %v440 = vsel %vm438, %v429, %v431
        %v441 = vsel %vm438, %v433, %v435
        %v442 = vsel %vm438, %v435, %v437
        %v449 = vadd.f32 %v400, %v439
        %v450 = vadd.f32 %v401, %v440
        %v451 = vadd.f32 %v402, %v431
        %v452 = vadd.f32 %v403, %v441
        %v453 = vadd.f32 %v404, %v442
        %v454 = vadd.f32 %v405, %v437
        %455 = vset.pattern.permute.xlu0 4
        %456 = vperm.xlu0 %455, %v284
        %v457 = vpop.permute.xlu0 %456
        %459 = vset.pattern.permute.xlu0 4
        %460 = vperm.xlu0 %459, %v285
        %v461 = vpop.permute.xlu0 %460
        %v463 = vmul.f32 %v278, %v457
        %v464 = vmul.f32 %v279, %v457
        %v465 = vmul.f32 %v280, %v457
        %v466 = vmul.f32 %v281, %v461
        %v467 = vmul.f32 %v282, %v461
        %v468 = vmul.f32 %v283, %v461
        %475 = vrot.lane.b32.xlu0 %v463, 109
        %v476 = vpop.permute.xlu0 %475
        %477 = vrot.lane.b32.xlu0 %v464, 109
        %v478 = vpop.permute.xlu0 %477
        %479 = vrot.lane.b32.xlu0 %v465, 109
        %v480 = vpop.permute.xlu0 %479
        %481 = vrot.lane.b32.xlu0 %v466, 109
        %v482 = vpop.permute.xlu0 %481
        %483 = vrot.lane.b32.xlu0 %v467, 109
        %v484 = vpop.permute.xlu0 %483
        %485 = vrot.lane.b32.xlu0 %v468, 109
        %v486 = vpop.permute.xlu0 %485
        %vm487 = vcmask 891904
        %v488 = vsel %vm487, %v476, %v478
        %v489 = vsel %vm487, %v478, %v480
        %v490 = vsel %vm487, %v482, %v484
        %v491 = vsel %vm487, %v484, %v486
        %v498 = vadd.f32 %v449, %v488
        %v499 = vadd.f32 %v450, %v489
        %v500 = vadd.f32 %v451, %v480
        %v501 = vadd.f32 %v452, %v490
        %v502 = vadd.f32 %v453, %v491
        %v503 = vadd.f32 %v454, %v486
        %504 = vset.pattern.permute.xlu0 5
        %505 = vperm.xlu0 %504, %v284
        %v506 = vpop.permute.xlu0 %505
        %508 = vset.pattern.permute.xlu0 5
        %509 = vperm.xlu0 %508, %v285
        %v510 = vpop.permute.xlu0 %509
        %v512 = vmul.f32 %v278, %v506
        %v513 = vmul.f32 %v279, %v506
        %v514 = vmul.f32 %v280, %v506
        %v515 = vmul.f32 %v281, %v510
        %v516 = vmul.f32 %v282, %v510
        %v517 = vmul.f32 %v283, %v510
        %524 = vrot.lane.b32.xlu0 %v512, 108
        %v525 = vpop.permute.xlu0 %524
        %526 = vrot.lane.b32.xlu0 %v513, 108
        %v527 = vpop.permute.xlu0 %526
        %528 = vrot.lane.b32.xlu0 %v514, 108
        %v529 = vpop.permute.xlu0 %528
        %530 = vrot.lane.b32.xlu0 %v515, 108
        %v531 = vpop.permute.xlu0 %530
        %532 = vrot.lane.b32.xlu0 %v516, 108
        %v533 = vpop.permute.xlu0 %532
        %534 = vrot.lane.b32.xlu0 %v517, 108
        %v535 = vpop.permute.xlu0 %534
        %vm536 = vcmask 883712
        %v537 = vsel %vm536, %v525, %v527
        %v538 = vsel %vm536, %v527, %v529
        %v539 = vsel %vm536, %v531, %v533
        %v540 = vsel %vm536, %v533, %v535
        %v547 = vadd.f32 %v498, %v537
        %v548 = vadd.f32 %v499, %v538
        %v549 = vadd.f32 %v500, %v529
        %v550 = vadd.f32 %v501, %v539
        %v551 = vadd.f32 %v502, %v540
        %v552 = vadd.f32 %v503, %v535
        %553 = vset.pattern.permute.xlu0 6
        %554 = vperm.xlu0 %553, %v284
        %v555 = vpop.permute.xlu0 %554
        %557 = vset.pattern.permute.xlu0 6
        %558 = vperm.xlu0 %557, %v285
        %v559 = vpop.permute.xlu0 %558
        %v561 = vmul.f32 %v278, %v555
        %v562 = vmul.f32 %v279, %v555
        %v563 = vmul.f32 %v280, %v555
        %v564 = vmul.f32 %v281, %v559
        %v565 = vmul.f32 %v282, %v559
        %v566 = vmul.f32 %v283, %v559
        %573 = vrot.lane.b32.xlu0 %v561, 92
        %v574 = vpop.permute.xlu0 %573
        %575 = vrot.lane.b32.xlu0 %v562, 92
        %v576 = vpop.permute.xlu0 %575
        %577 = vrot.lane.b32.xlu0 %v563, 92
        %v578 = vpop.permute.xlu0 %577
        %579 = vrot.lane.b32.xlu0 %v564, 92
        %v580 = vpop.permute.xlu0 %579
        %581 = vrot.lane.b32.xlu0 %v565, 92
        %v582 = vpop.permute.xlu0 %581
        %583 = vrot.lane.b32.xlu0 %v566, 92
        %v584 = vpop.permute.xlu0 %583
        %vm585 = vcmask 752640
        %v586 = vsel %vm585, %v574, %v576
        %v587 = vsel %vm585, %v576, %v578
        %v588 = vsel %vm585, %v580, %v582
        %v589 = vsel %vm585, %v582, %v584
        %v596 = vadd.f32 %v547, %v586
        %v597 = vadd.f32 %v548, %v587
        %v598 = vadd.f32 %v549, %v578
        %v599 = vadd.f32 %v550, %v588
        %v600 = vadd.f32 %v551, %v589
        %v601 = vadd.f32 %v552, %v584
        %602 = vset.pattern.permute.xlu0 7
        %603 = vperm.xlu0 %602, %v284
        %v604 = vpop.permute.xlu0 %603
        %606 = vset.pattern.permute.xlu0 7
        %607 = vperm.xlu0 %606, %v285
        %v608 = vpop.permute.xlu0 %607
        %v610 = vmul.f32 %v278, %v604
        %v611 = vmul.f32 %v279, %v604
        %v612 = vmul.f32 %v280, %v604
        %v613 = vmul.f32 %v281, %v608
        %v614 = vmul.f32 %v282, %v608
        %v615 = vmul.f32 %v283, %v608
        %622 = vrot.lane.b32.xlu0 %v610, 91
        %v623 = vpop.permute.xlu0 %622
        %624 = vrot.lane.b32.xlu0 %v611, 91
        %v625 = vpop.permute.xlu0 %624
        %626 = vrot.lane.b32.xlu0 %v612, 91
        %v627 = vpop.permute.xlu0 %626
        %628 = vrot.lane.b32.xlu0 %v613, 91
        %v629 = vpop.permute.xlu0 %628
        %630 = vrot.lane.b32.xlu0 %v614, 91
        %v631 = vpop.permute.xlu0 %630
        %632 = vrot.lane.b32.xlu0 %v615, 91
        %v633 = vpop.permute.xlu0 %632
        %vm634 = vcmask 744448
        %v635 = vsel %vm634, %v623, %v625
        %v636 = vsel %vm634, %v625, %v627
        %v637 = vsel %vm634, %v629, %v631
        %v638 = vsel %vm634, %v631, %v633
        %v645 = vadd.f32 %v596, %v635
        %v646 = vadd.f32 %v597, %v636
        %v647 = vadd.f32 %v598, %v627
        %v648 = vadd.f32 %v599, %v637
        %v649 = vadd.f32 %v600, %v638
        %v650 = vadd.f32 %v601, %v633
        %651 = vset.pattern.permute.xlu0 8
        %652 = vperm.xlu0 %651, %v284
        %v653 = vpop.permute.xlu0 %652
        %655 = vset.pattern.permute.xlu0 8
        %656 = vperm.xlu0 %655, %v285
        %v657 = vpop.permute.xlu0 %656
        %v659 = vmul.f32 %v278, %v653
        %v660 = vmul.f32 %v279, %v653
        %v661 = vmul.f32 %v280, %v653
        %v662 = vmul.f32 %v281, %v657
        %v663 = vmul.f32 %v282, %v657
        %v664 = vmul.f32 %v283, %v657
        %671 = vrot.lane.b32.xlu0 %v659, 90
        %v672 = vpop.permute.xlu0 %671
        %673 = vrot.lane.b32.xlu0 %v660, 90
        %v674 = vpop.permute.xlu0 %673
        %675 = vrot.lane.b32.xlu0 %v661, 90
        %v676 = vpop.permute.xlu0 %675
        %677 = vrot.lane.b32.xlu0 %v662, 90
        %v678 = vpop.permute.xlu0 %677
        %679 = vrot.lane.b32.xlu0 %v663, 90
        %v680 = vpop.permute.xlu0 %679
        %681 = vrot.lane.b32.xlu0 %v664, 90
        %v682 = vpop.permute.xlu0 %681
        %vm683 = vcmask 736256
        %v684 = vsel %vm683, %v672, %v674
        %v685 = vsel %vm683, %v674, %v676
        %v686 = vsel %vm683, %v678, %v680
        %v687 = vsel %vm683, %v680, %v682
        %v694 = vadd.f32 %v645, %v684
        %v695 = vadd.f32 %v646, %v685
        %v696 = vadd.f32 %v647, %v676
        %v697 = vadd.f32 %v648, %v686
        %v698 = vadd.f32 %v649, %v687
        %v699 = vadd.f32 %v650, %v682
        %vm700 = vcmp.gt.f32.partialorder %v694, 0.0
        %vm701 = vcmp.gt.f32.partialorder %v695, 0.0
        %vm702 = vcmp.gt.f32.partialorder %v696, 0.0
        %vm703 = vcmp.gt.f32.partialorder %v697, 0.0
        %vm704 = vcmp.gt.f32.partialorder %v698, 0.0
        %vm705 = vcmp.gt.f32.partialorder %v699, 0.0
        %v706 = vmul.f32 %v694, 0.1
        %v707 = vmul.f32 %v695, 0.1
        %v708 = vmul.f32 %v696, 0.1
        %v709 = vmul.f32 %v697, 0.1
        %v710 = vmul.f32 %v698, 0.1
        %v711 = vmul.f32 %v699, 0.1
        %v712 = vsel %vm700, %v694, %v706
        %v713 = vsel %vm701, %v695, %v707
        %v714 = vsel %vm702, %v696, %v708
        %v715 = vsel %vm703, %v697, %v709
        %v716 = vsel %vm704, %v698, %v710
        %v717 = vsel %vm705, %v699, %v711
        %v718 = vld [vmem:[%s4] sm:$0x7]
        %v720 = vlaneseq
        %v721 = vshrl.u32 %v720, 7
        %v722 = vsub.s32 0, %v721
        %v723 = vrot.slane %v718, %v722
        %v724 = vlaneseq
        %v725 = vshrl.u32 %v724, 7
        %v726 = vsub.s32 1, %v725
        %v727 = vrot.slane %v718, %v726
        %v728 = vlaneseq
        %v729 = vshrl.u32 %v728, 7
        %v730 = vsub.s32 2, %v729
        %v731 = vrot.slane %v718, %v730
        %v735 = vmul.f32 %v712, %v723
        %v736 = vmul.f32 %v713, %v727
        %v737 = vmul.f32 %v714, %v731
        %v738 = vmul.f32 %v715, %v723
        %v739 = vmul.f32 %v716, %v727
        %v740 = vmul.f32 %v717, %v731
        %741 = vst [vmem:[#allocation2] sm:$0xff] 0.0
        %742 = vst [vmem:[#allocation2 + $0x8] sm:$0xff] 0.0
        %vm743 = vcmask 556032
        %744 = vst.msk [vmem:[#allocation2 + $0x10] sm:$0xff] %vm743, 0.0
        %745 = vst [vmem:[#allocation2 + $0x18] sm:$0xff] 0.0
        %746 = vst [vmem:[#allocation2 + $0x20] sm:$0xff] 0.0
        %747 = vst.msk [vmem:[#allocation2 + $0x28] sm:$0xff] %vm743, 0.0
        %754 = vrot.lane.b32.xlu0 %v735, 19
        %v755 = vpop.permute.xlu0 %754
        %756 = vrot.lane.b32.xlu0 %v736, 19
        %v757 = vpop.permute.xlu0 %756
        %758 = vrot.lane.b32.xlu0 %v737, 19
        %v759 = vpop.permute.xlu0 %758
        %760 = vrot.lane.b32.xlu0 %v738, 19
        %v761 = vpop.permute.xlu0 %760
        %762 = vrot.lane.b32.xlu0 %v739, 19
        %v763 = vpop.permute.xlu0 %762
        %764 = vrot.lane.b32.xlu0 %v740, 19
        %v765 = vpop.permute.xlu0 %764
        %vm766 = vcmask 154624
        %v767 = vsel %vm766, %v755, %v757
        %v768 = vsel %vm766, %v757, %v759
        %v769 = vsel %vm766, %v761, %v763
        %v770 = vsel %vm766, %v763, %v765
        %vm777 = vcmask 1047704
        %778 = vst.msk [vmem:[#allocation2] sm:$0xff] %vm777, %v755
        %779 = vst [vmem:[#allocation2 + $0x8] sm:$0xff] %v767
        %vm780 = vcmask 400384
        %781 = vst.msk [vmem:[#allocation2 + $0x10] sm:$0xff] %vm780, %v768
        %782 = vst.msk [vmem:[#allocation2 + $0x18] sm:$0xff] %vm777, %v761
        %783 = vst [vmem:[#allocation2 + $0x20] sm:$0xff] %v769
        %784 = vst.msk [vmem:[#allocation2 + $0x28] sm:$0xff] %vm780, %v770
        %v785 = vld [vmem:[#allocation2] sm:$0xff]
        %v786 = vld [vmem:[#allocation2 + $0x8] sm:$0xff]
        %v787 = vld [vmem:[#allocation2 + $0x10] sm:$0xff]
        %v788 = vld [vmem:[#allocation2 + $0x18] sm:$0xff]
        %v789 = vld [vmem:[#allocation2 + $0x20] sm:$0xff]
        %v790 = vld [vmem:[#allocation2 + $0x28] sm:$0xff]
        %v791 = vld [vmem:[#allocation6] sm:$0xff]
        %v792 = vld [vmem:[#allocation6 + $0x8] sm:$0xff]
        %s793 = scalar_lea.vmem [#allocation6], 16
        %v794 = vld [vmem:[%s793] sm:$0xff]
        %v795 = vld [vmem:[%s793 + $0x8] sm:$0xff]
        %802 = vrot.lane.b32.xlu0 %v785, 127
        %v803 = vpop.permute.xlu0 %802
        %804 = vrot.lane.b32.xlu0 %v786, 127
        %v805 = vpop.permute.xlu0 %804
        %806 = vrot.lane.b32.xlu0 %v787, 127
        %v807 = vpop.permute.xlu0 %806
        %808 = vrot.lane.b32.xlu0 %v788, 127
        %v809 = vpop.permute.xlu0 %808
        %810 = vrot.lane.b32.xlu0 %v789, 127
        %v811 = vpop.permute.xlu0 %810
        %812 = vrot.lane.b32.xlu0 %v790, 127
        %v813 = vpop.permute.xlu0 %812
        %v814 = vsel %vm340, %v803, %v805
        %v815 = vsel %vm340, %v805, %v807
        %v816 = vsel %vm340, %v809, %v811
        %v817 = vsel %vm340, %v811, %v813
        %vm824 = vcmask 130048
        %v826 = vsel %vm824, %v794, 0
        %v829 = vsel %vm824, %v795, 0
        %831 = vmatprep.subr.mxu0 %v815
        %832 = vmatpush1.msra.mxu0 %v814
        %833 = vmatprep.subr.mxu0 %v817
        %834 = vmatpush1.msra.mxu0 %v816
        %835 = vmatprep.subr.mxu0 0.0
        %836 = vmatpush1.msra.mxu0 0.0
        %837 = vmatprep.subr.mxu0 0.0
        %838 = vmatpush1.msra.mxu0 0.0
        %839 = vmatprep.subr.mxu0 0.0
        %840 = vmatpush1.msra.mxu0 0.0
        %841 = vmatprep.subr.mxu0 0.0
        %842 = vmatpush1.msra.mxu0 0.0
        %843 = vmatprep.subr.mxu0 0.0
        %844 = vmatpush1.msra.mxu0 0.0
        %845 = vmatprep.subr.mxu0 0.0
        %846 = vmatpush1.msra.mxu0 0.0
        %847 = vmatprep.subr.mxu0 0.0
        %848 = vmatpush1.msra.mxu0 0.0
        %849 = vmatprep.subr.mxu0 0.0
        %850 = vmatpush1.msra.mxu0 0.0
        %851 = vmatprep.subr.mxu0 0.0
        %852 = vmatpush1.msra.mxu0 0.0
        %853 = vmatprep.subr.mxu0 0.0
        %854 = vmatpush1.msra.mxu0 0.0
        %855 = vmatprep.subr.mxu0 0.0
        %856 = vmatpush1.msra.mxu0 0.0
        %857 = vmatprep.subr.mxu0 0.0
        %858 = vmatpush1.msra.mxu0 0.0
        %859 = vmatprep.subr.mxu0 0.0
        %860 = vmatpush1.msra.mxu0 0.0
        %861 = vmatprep.subr.mxu0 0.0
        %862 = vmatpush1.msra.mxu0 0.0
        %863 = vmatprep.subr.mxu0 0.0
        %864 = vmatpush1.msra.mxu0 0.0
        %865 = vmatprep.subr.mxu0 0.0
        %866 = vmatpush1.msra.mxu0 0.0
        %867 = vmatprep.subr.mxu0 0.0
        %868 = vmatpush1.msra.mxu0 0.0
        %869 = vmatprep.subr.mxu0 0.0
        %870 = vmatpush1.msra.mxu0 0.0
        %871 = vmatprep.subr.mxu0 0.0
        %872 = vmatpush1.msra.mxu0 0.0
        %873 = vmatprep.subr.mxu0 0.0
        %874 = vmatpush1.msra.mxu0 0.0
        %875 = vmatprep.subr.mxu0 0.0
        %876 = vmatpush1.msra.mxu0 0.0
        %877 = vmatprep.subr.mxu0 0.0
        %878 = vmatpush1.msra.mxu0 0.0
        %879 = vmatprep.subr.mxu0 0.0
        %880 = vmatpush1.msra.mxu0 0.0
        %881 = vmatprep.subr.mxu0 0.0
        %882 = vmatpush1.msra.mxu0 0.0
        %883 = vmatprep.subr.mxu0 0.0
        %884 = vmatpush1.msra.mxu0 0.0
        %885 = vmatprep.subr.mxu0 0.0
        %886 = vmatpush1.msra.mxu0 0.0
        %887 = vmatprep.subr.mxu0 0.0
        %888 = vmatpush1.msra.mxu0 0.0
        %889 = vmatprep.subr.mxu0 0.0
        %890 = vmatpush1.msra.mxu0 0.0
        %891 = vmatprep.subr.mxu0 0.0
        %892 = vmatpush1.msra.mxu0 0.0
        %893 = vmatprep.subr.mxu0 0.0
        %894 = vmatpush1.msra.mxu0 0.0
        %895 = vmatprep.mubr.f32.mxu0 0.0
        %896 = vmatmul.mubr.f32.gmra.mrb[0].mxu0 %v826
        %v897 = vpop.f32.mrb[0].mxu0
        %v898 = vadd.f32 0.0, %v897
        %v899 = vpop.f32.mrb[0].mxu0
        %v900 = vadd.f32 0.0, %v899
        %901 = vmatprep.mubr.f32.mxu0 0.0
        %902 = vmatmul.mubr.f32.gmra.mrb[0].mxu0 %v829
        %v903 = vpop.f32.mrb[0].mxu0
        %v904 = vadd.f32 0.0, %v903
        %v905 = vpop.f32.mrb[0].mxu0
        %v906 = vadd.f32 0.0, %v905
        %907 = vdwg.mxu0
        %908 = vmatprep.subr.mxu0 0.0
        %909 = vmatpush1.msra.mxu0 %v807
        %910 = vmatprep.subr.mxu0 0.0
        %911 = vmatpush1.msra.mxu0 %v813
        %912 = vmatprep.subr.mxu0 0.0
        %913 = vmatpush1.msra.mxu0 0.0
        %914 = vmatprep.subr.mxu0 0.0
        %915 = vmatpush1.msra.mxu0 0.0
        %916 = vmatprep.subr.mxu0 0.0
        %917 = vmatpush1.msra.mxu0 0.0
        %918 = vmatprep.subr.mxu0 0.0
        %919 = vmatpush1.msra.mxu0 0.0
        %920 = vmatprep.subr.mxu0 0.0
        %921 = vmatpush1.msra.mxu0 0.0
        %922 = vmatprep.subr.mxu0 0.0
        %923 = vmatpush1.msra.mxu0 0.0
        %924 = vmatprep.subr.mxu0 0.0
        %925 = vmatpush1.msra.mxu0 0.0
        %926 = vmatprep.subr.mxu0 0.0
        %927 = vmatpush1.msra.mxu0 0.0
        %928 = vmatprep.subr.mxu0 0.0
        %929 = vmatpush1.msra.mxu0 0.0
        %930 = vmatprep.subr.mxu0 0.0
        %931 = vmatpush1.msra.mxu0 0.0
        %932 = vmatprep.subr.mxu0 0.0
        %933 = vmatpush1.msra.mxu0 0.0
        %934 = vmatprep.subr.mxu0 0.0
        %935 = vmatpush1.msra.mxu0 0.0
        %936 = vmatprep.subr.mxu0 0.0
        %937 = vmatpush1.msra.mxu0 0.0
        %938 = vmatprep.subr.mxu0 0.0
        %939 = vmatpush1.msra.mxu0 0.0
        %940 = vmatprep.subr.mxu0 0.0
        %941 = vmatpush1.msra.mxu0 0.0
        %942 = vmatprep.subr.mxu0 0.0
        %943 = vmatpush1.msra.mxu0 0.0
        %944 = vmatprep.subr.mxu0 0.0
        %945 = vmatpush1.msra.mxu0 0.0
        %946 = vmatprep.subr.mxu0 0.0
        %947 = vmatpush1.msra.mxu0 0.0
        %948 = vmatprep.subr.mxu0 0.0
        %949 = vmatpush1.msra.mxu0 0.0
        %950 = vmatprep.subr.mxu0 0.0
        %951 = vmatpush1.msra.mxu0 0.0
        %952 = vmatprep.subr.mxu0 0.0
        %953 = vmatpush1.msra.mxu0 0.0
        %954 = vmatprep.subr.mxu0 0.0
        %955 = vmatpush1.msra.mxu0 0.0
        %956 = vmatprep.subr.mxu0 0.0
        %957 = vmatpush1.msra.mxu0 0.0
        %958 = vmatprep.subr.mxu0 0.0
        %959 = vmatpush1.msra.mxu0 0.0
        %960 = vmatprep.subr.mxu0 0.0
        %961 = vmatpush1.msra.mxu0 0.0
        %962 = vmatprep.subr.mxu0 0.0
        %963 = vmatpush1.msra.mxu0 0.0
        %964 = vmatprep.subr.mxu0 0.0
        %965 = vmatpush1.msra.mxu0 0.0
        %966 = vmatprep.subr.mxu0 0.0
        %967 = vmatpush1.msra.mxu0 0.0
        %968 = vmatprep.subr.mxu0 0.0
        %969 = vmatpush1.msra.mxu0 0.0
        %970 = vmatprep.subr.mxu0 0.0
        %971 = vmatpush1.msra.mxu0 0.0
        %972 = vmatprep.mubr.f32.mxu0 0.0
        %973 = vmatmul.mubr.f32.gmra.mrb[0].mxu0 %v826
        %v974 = vpop.f32.mrb[0].mxu0
        %v975 = vadd.f32 0.0, %v974
        %v976 = vpop.f32.mrb[0].mxu0
        %977 = vmatprep.mubr.f32.mxu0 0.0
        %978 = vmatmul.mubr.f32.gmra.mrb[0].mxu0 %v829
        %v979 = vpop.f32.mrb[0].mxu0
        %v980 = vadd.f32 0.0, %v979
        %v981 = vpop.f32.mrb[0].mxu0
        %982 = vdwg.mxu0
        %v984 = vsel %vm824, %v791, 0
        %v987 = vsel %vm824, %v792, 0
        %989 = vmatprep.subr.mxu0 %v786
        %990 = vmatpush1.msra.mxu0 %v785
        %991 = vmatprep.subr.mxu0 %v789
        %992 = vmatpush1.msra.mxu0 %v788
        %993 = vmatprep.subr.mxu0 0.0
        %994 = vmatpush1.msra.mxu0 0.0
        %995 = vmatprep.subr.mxu0 0.0
        %996 = vmatpush1.msra.mxu0 0.0
        %997 = vmatprep.subr.mxu0 0.0
        %998 = vmatpush1.msra.mxu0 0.0
        %999 = vmatprep.subr.mxu0 0.0
        %1000 = vmatpush1.msra.mxu0 0.0
        %1001 = vmatprep.subr.mxu0 0.0
        %1002 = vmatpush1.msra.mxu0 0.0
        %1003 = vmatprep.subr.mxu0 0.0
        %1004 = vmatpush1.msra.mxu0 0.0
        %1005 = vmatprep.subr.mxu0 0.0
        %1006 = vmatpush1.msra.mxu0 0.0
        %1007 = vmatprep.subr.mxu0 0.0
        %1008 = vmatpush1.msra.mxu0 0.0
        %1009 = vmatprep.subr.mxu0 0.0
        %1010 = vmatpush1.msra.mxu0 0.0
        %1011 = vmatprep.subr.mxu0 0.0
        %1012 = vmatpush1.msra.mxu0 0.0
        %1013 = vmatprep.subr.mxu0 0.0
        %1014 = vmatpush1.msra.mxu0 0.0
        %1015 = vmatprep.subr.mxu0 0.0
        %1016 = vmatpush1.msra.mxu0 0.0
        %1017 = vmatprep.subr.mxu0 0.0
        %1018 = vmatpush1.msra.mxu0 0.0
        %1019 = vmatprep.subr.mxu0 0.0
        %1020 = vmatpush1.msra.mxu0 0.0
        %1021 = vmatprep.subr.mxu0 0.0
        %1022 = vmatpush1.msra.mxu0 0.0
        %1023 = vmatprep.subr.mxu0 0.0
        %1024 = vmatpush1.msra.mxu0 0.0
        %1025 = vmatprep.subr.mxu0 0.0
        %1026 = vmatpush1.msra.mxu0 0.0
        %1027 = vmatprep.subr.mxu0 0.0
        %1028 = vmatpush1.msra.mxu0 0.0
        %1029 = vmatprep.subr.mxu0 0.0
        %1030 = vmatpush1.msra.mxu0 0.0
        %1031 = vmatprep.subr.mxu0 0.0
        %1032 = vmatpush1.msra.mxu0 0.0
        %1033 = vmatprep.subr.mxu0 0.0
        %1034 = vmatpush1.msra.mxu0 0.0
        %1035 = vmatprep.subr.mxu0 0.0
        %1036 = vmatpush1.msra.mxu0 0.0
        %1037 = vmatprep.subr.mxu0 0.0
        %1038 = vmatpush1.msra.mxu0 0.0
        %1039 = vmatprep.subr.mxu0 0.0
        %1040 = vmatpush1.msra.mxu0 0.0
        %1041 = vmatprep.subr.mxu0 0.0
        %1042 = vmatpush1.msra.mxu0 0.0
        %1043 = vmatprep.subr.mxu0 0.0
        %1044 = vmatpush1.msra.mxu0 0.0
        %1045 = vmatprep.subr.mxu0 0.0
        %1046 = vmatpush1.msra.mxu0 0.0
        %1047 = vmatprep.subr.mxu0 0.0
        %1048 = vmatpush1.msra.mxu0 0.0
        %1049 = vmatprep.subr.mxu0 0.0
        %1050 = vmatpush1.msra.mxu0 0.0
        %1051 = vmatprep.subr.mxu0 0.0
        %1052 = vmatpush1.msra.mxu0 0.0
        %1053 = vmatprep.mubr.f32.mxu0 0.0
        %1054 = vmatmul.mubr.f32.gmra.mrb[0].mxu0 %v984
        %v1055 = vpop.f32.mrb[0].mxu0
        %v1056 = vadd.f32 %v898, %v1055
        %v1057 = vpop.f32.mrb[0].mxu0
        %v1058 = vadd.f32 %v900, %v1057
        %1059 = vmatprep.mubr.f32.mxu0 0.0
        %1060 = vmatmul.mubr.f32.gmra.mrb[0].mxu0 %v987
        %v1061 = vpop.f32.mrb[0].mxu0
        %v1062 = vadd.f32 %v904, %v1061
        %v1063 = vpop.f32.mrb[0].mxu0
        %v1064 = vadd.f32 %v906, %v1063
        %1065 = vdwg.mxu0
        %1066 = vmatprep.subr.mxu0 0.0
        %1067 = vmatpush1.msra.mxu0 %v787
        %1068 = vmatprep.subr.mxu0 0.0
        %1069 = vmatpush1.msra.mxu0 %v790
        %1070 = vmatprep.subr.mxu0 0.0
        %1071 = vmatpush1.msra.mxu0 0.0
        %1072 = vmatprep.subr.mxu0 0.0
        %1073 = vmatpush1.msra.mxu0 0.0
        %1074 = vmatprep.subr.mxu0 0.0
        %1075 = vmatpush1.msra.mxu0 0.0
        %1076 = vmatprep.subr.mxu0 0.0
        %1077 = vmatpush1.msra.mxu0 0.0
        %1078 = vmatprep.subr.mxu0 0.0
        %1079 = vmatpush1.msra.mxu0 0.0
        %1080 = vmatprep.subr.mxu0 0.0
        %1081 = vmatpush1.msra.mxu0 0.0
        %1082 = vmatprep.subr.mxu0 0.0
        %1083 = vmatpush1.msra.mxu0 0.0
        %1084 = vmatprep.subr.mxu0 0.0
        %1085 = vmatpush1.msra.mxu0 0.0
        %1086 = vmatprep.subr.mxu0 0.0
        %1087 = vmatpush1.msra.mxu0 0.0
        %1088 = vmatprep.subr.mxu0 0.0
        %1089 = vmatpush1.msra.mxu0 0.0
        %1090 = vmatprep.subr.mxu0 0.0
        %1091 = vmatpush1.msra.mxu0 0.0
        %1092 = vmatprep.subr.mxu0 0.0
        %1093 = vmatpush1.msra.mxu0 0.0
        %1094 = vmatprep.subr.mxu0 0.0
        %1095 = vmatpush1.msra.mxu0 0.0
        %1096 = vmatprep.subr.mxu0 0.0
        %1097 = vmatpush1.msra.mxu0 0.0
        %1098 = vmatprep.subr.mxu0 0.0
        %1099 = vmatpush1.msra.mxu0 0.0
        %1100 = vmatprep.subr.mxu0 0.0
        %1101 = vmatpush1.msra.mxu0 0.0
        %1102 = vmatprep.subr.mxu0 0.0
        %1103 = vmatpush1.msra.mxu0 0.0
        %1104 = vmatprep.subr.mxu0 0.0
        %1105 = vmatpush1.msra.mxu0 0.0
        %1106 = vmatprep.subr.mxu0 0.0
        %1107 = vmatpush1.msra.mxu0 0.0
        %1108 = vmatprep.subr.mxu0 0.0
        %1109 = vmatpush1.msra.mxu0 0.0
        %1110 = vmatprep.subr.mxu0 0.0
        %1111 = vmatpush1.msra.mxu0 0.0
        %1112 = vmatprep.subr.mxu0 0.0
        %1113 = vmatpush1.msra.mxu0 0.0
        %1114 = vmatprep.subr.mxu0 0.0
        %1115 = vmatpush1.msra.mxu0 0.0
        %1116 = vmatprep.subr.mxu0 0.0
        %1117 = vmatpush1.msra.mxu0 0.0
        %1118 = vmatprep.subr.mxu0 0.0
        %1119 = vmatpush1.msra.mxu0 0.0
        %1120 = vmatprep.subr.mxu0 0.0
        %1121 = vmatpush1.msra.mxu0 0.0
        %1122 = vmatprep.subr.mxu0 0.0
        %1123 = vmatpush1.msra.mxu0 0.0
        %1124 = vmatprep.subr.mxu0 0.0
        %1125 = vmatpush1.msra.mxu0 0.0
        %1126 = vmatprep.subr.mxu0 0.0
        %1127 = vmatpush1.msra.mxu0 0.0
        %1128 = vmatprep.subr.mxu0 0.0
        %1129 = vmatpush1.msra.mxu0 0.0
        %1130 = vmatprep.mubr.f32.mxu0 0.0
        %1131 = vmatmul.mubr.f32.gmra.mrb[0].mxu0 %v984
        %v1132 = vpop.f32.mrb[0].mxu0
        %v1133 = vadd.f32 %v975, %v1132
        %v1134 = vpop.f32.mrb[0].mxu0
        %1135 = vmatprep.mubr.f32.mxu0 0.0
        %1136 = vmatmul.mubr.f32.gmra.mrb[0].mxu0 %v987
        %v1137 = vpop.f32.mrb[0].mxu0
        %v1138 = vadd.f32 %v980, %v1137
        %v1139 = vpop.f32.mrb[0].mxu0
        %1140 = vdwg.mxu0
        %s1141 = scalar_lea.vmem [#allocation6], 32
        %v1142 = vld [vmem:[%s1141] sm:$0xff]
        %v1143 = vld [vmem:[%s1141 + $0x8] sm:$0xff]
        %1144 = vrot.lane.b32.xlu0 %v785, 126
        %v1145 = vpop.permute.xlu0 %1144
        %1146 = vrot.lane.b32.xlu0 %v786, 126
        %v1147 = vpop.permute.xlu0 %1146
        %1148 = vrot.lane.b32.xlu0 %v787, 126
        %v1149 = vpop.permute.xlu0 %1148
        %1150 = vrot.lane.b32.xlu0 %v788, 126
        %v1151 = vpop.permute.xlu0 %1150
        %1152 = vrot.lane.b32.xlu0 %v789, 126
        %v1153 = vpop.permute.xlu0 %1152
        %1154 = vrot.lane.b32.xlu0 %v790, 126
        %v1155 = vpop.permute.xlu0 %1154
        %v1156 = vsel %vm389, %v1145, %v1147
        %v1157 = vsel %vm389, %v1147, %v1149
        %v1158 = vsel %vm389, %v1151, %v1153
        %v1159 = vsel %vm389, %v1153, %v1155
        %v1167 = vsel %vm824, %v1142, 0
        %v1170 = vsel %vm824, %v1143, 0
        %1172 = vmatprep.subr.mxu0 %v1157
        %1173 = vmatpush1.msra.mxu0 %v1156
        %1174 = vmatprep.subr.mxu0 %v1159
        %1175 = vmatpush1.msra.mxu0 %v1158
        %1176 = vmatprep.subr.mxu0 0.0
        %1177 = vmatpush1.msra.mxu0 0.0
        %1178 = vmatprep.subr.mxu0 0.0
        %1179 = vmatpush1.msra.mxu0 0.0
        %1180 = vmatprep.subr.mxu0 0.0
        %1181 = vmatpush1.msra.mxu0 0.0
        %1182 = vmatprep.subr.mxu0 0.0
        %1183 = vmatpush1.msra.mxu0 0.0
        %1184 = vmatprep.subr.mxu0 0.0
        %1185 = vmatpush1.msra.mxu0 0.0
        %1186 = vmatprep.subr.mxu0 0.0
        %1187 = vmatpush1.msra.mxu0 0.0
        %1188 = vmatprep.subr.mxu0 0.0
        %1189 = vmatpush1.msra.mxu0 0.0
        %1190 = vmatprep.subr.mxu0 0.0
        %1191 = vmatpush1.msra.mxu0 0.0
        %1192 = vmatprep.subr.mxu0 0.0
        %1193 = vmatpush1.msra.mxu0 0.0
        %1194 = vmatprep.subr.mxu0 0.0
        %1195 = vmatpush1.msra.mxu0 0.0
        %1196 = vmatprep.subr.mxu0 0.0
        %1197 = vmatpush1.msra.mxu0 0.0
        %1198 = vmatprep.subr.mxu0 0.0
        %1199 = vmatpush1.msra.mxu0 0.0
        %1200 = vmatprep.subr.mxu0 0.0
        %1201 = vmatpush1.msra.mxu0 0.0
        %1202 = vmatprep.subr.mxu0 0.0
        %1203 = vmatpush1.msra.mxu0 0.0
        %1204 = vmatprep.subr.mxu0 0.0
        %1205 = vmatpush1.msra.mxu0 0.0
        %1206 = vmatprep.subr.mxu0 0.0
        %1207 = vmatpush1.msra.mxu0 0.0
        %1208 = vmatprep.subr.mxu0 0.0
        %1209 = vmatpush1.msra.mxu0 0.0
        %1210 = vmatprep.subr.mxu0 0.0
        %1211 = vmatpush1.msra.mxu0 0.0
        %1212 = vmatprep.subr.mxu0 0.0
        %1213 = vmatpush1.msra.mxu0 0.0
        %1214 = vmatprep.subr.mxu0 0.0
        %1215 = vmatpush1.msra.mxu0 0.0
        %1216 = vmatprep.subr.mxu0 0.0
        %1217 = vmatpush1.msra.mxu0 0.0
        %1218 = vmatprep.subr.mxu0 0.0
        %1219 = vmatpush1.msra.mxu0 0.0
        %1220 = vmatprep.subr.mxu0 0.0
        %1221 = vmatpush1.msra.mxu0 0.0
        %1222 = vmatprep.subr.mxu0 0.0
        %1223 = vmatpush1.msra.mxu0 0.0
        %1224 = vmatprep.subr.mxu0 0.0
        %1225 = vmatpush1.msra.mxu0 0.0
        %1226 = vmatprep.subr.mxu0 0.0
        %1227 = vmatpush1.msra.mxu0 0.0
        %1228 = vmatprep.subr.mxu0 0.0
        %1229 = vmatpush1.msra.mxu0 0.0
        %1230 = vmatprep.subr.mxu0 0.0
        %1231 = vmatpush1.msra.mxu0 0.0
        %1232 = vmatprep.subr.mxu0 0.0
        %1233 = vmatpush1.msra.mxu0 0.0
        %1234 = vmatprep.subr.mxu0 0.0
        %1235 = vmatpush1.msra.mxu0 0.0
        %1236 = vmatprep.mubr.f32.mxu0 0.0
        %1237 = vmatmul.mubr.f32.gmra.mrb[0].mxu0 %v1167
        %v1238 = vpop.f32.mrb[0].mxu0
        %v1239 = vadd.f32 0.0, %v1238
        %v1240 = vpop.f32.mrb[0].mxu0
        %v1241 = vadd.f32 0.0, %v1240
        %1242 = vmatprep.mubr.f32.mxu0 0.0
        %1243 = vmatmul.mubr.f32.gmra.mrb[0].mxu0 %v1170
        %v1244 = vpop.f32.mrb[0].mxu0
        %v1245 = vadd.f32 0.0, %v1244
        %v1246 = vpop.f32.mrb[0].mxu0
        %v1247 = vadd.f32 0.0, %v1246
        %1248 = vdwg.mxu0
        %1249 = vmatprep.subr.mxu0 0.0
        %1250 = vmatpush1.msra.mxu0 %v1149
        %1251 = vmatprep.subr.mxu0 0.0
        %1252 = vmatpush1.msra.mxu0 %v1155
        %1253 = vmatprep.subr.mxu0 0.0
        %1254 = vmatpush1.msra.mxu0 0.0
        %1255 = vmatprep.subr.mxu0 0.0
        %1256 = vmatpush1.msra.mxu0 0.0
        %1257 = vmatprep.subr.mxu0 0.0
        %1258 = vmatpush1.msra.mxu0 0.0
        %1259 = vmatprep.subr.mxu0 0.0
        %1260 = vmatpush1.msra.mxu0 0.0
        %1261 = vmatprep.subr.mxu0 0.0
        %1262 = vmatpush1.msra.mxu0 0.0
        %1263 = vmatprep.subr.mxu0 0.0
        %1264 = vmatpush1.msra.mxu0 0.0
        %1265 = vmatprep.subr.mxu0 0.0
        %1266 = vmatpush1.msra.mxu0 0.0
        %1267 = vmatprep.subr.mxu0 0.0
        %1268 = vmatpush1.msra.mxu0 0.0
        %1269 = vmatprep.subr.mxu0 0.0
        %1270 = vmatpush1.msra.mxu0 0.0
        %1271 = vmatprep.subr.mxu0 0.0
        %1272 = vmatpush1.msra.mxu0 0.0
        %1273 = vmatprep.subr.mxu0 0.0
        %1274 = vmatpush1.msra.mxu0 0.0
        %1275 = vmatprep.subr.mxu0 0.0
        %1276 = vmatpush1.msra.mxu0 0.0
        %1277 = vmatprep.subr.mxu0 0.0
        %1278 = vmatpush1.msra.mxu0 0.0
        %1279 = vmatprep.subr.mxu0 0.0
        %1280 = vmatpush1.msra.mxu0 0.0
        %1281 = vmatprep.subr.mxu0 0.0
        %1282 = vmatpush1.msra.mxu0 0.0
        %1283 = vmatprep.subr.mxu0 0.0
        %1284 = vmatpush1.msra.mxu0 0.0
        %1285 = vmatprep.subr.mxu0 0.0
        %1286 = vmatpush1.msra.mxu0 0.0
        %1287 = vmatprep.subr.mxu0 0.0
        %1288 = vmatpush1.msra.mxu0 0.0
        %1289 = vmatprep.subr.mxu0 0.0
        %1290 = vmatpush1.msra.mxu0 0.0
        %1291 = vmatprep.subr.mxu0 0.0
        %1292 = vmatpush1.msra.mxu0 0.0
        %1293 = vmatprep.subr.mxu0 0.0
        %1294 = vmatpush1.msra.mxu0 0.0
        %1295 = vmatprep.subr.mxu0 0.0
        %1296 = vmatpush1.msra.mxu0 0.0
        %1297 = vmatprep.subr.mxu0 0.0
        %1298 = vmatpush1.msra.mxu0 0.0
        %1299 = vmatprep.subr.mxu0 0.0
        %1300 = vmatpush1.msra.mxu0 0.0
        %1301 = vmatprep.subr.mxu0 0.0
        %1302 = vmatpush1.msra.mxu0 0.0
        %1303 = vmatprep.subr.mxu0 0.0
        %1304 = vmatpush1.msra.mxu0 0.0
        %1305 = vmatprep.subr.mxu0 0.0
        %1306 = vmatpush1.msra.mxu0 0.0
        %1307 = vmatprep.subr.mxu0 0.0
        %1308 = vmatpush1.msra.mxu0 0.0
        %1309 = vmatprep.subr.mxu0 0.0
        %1310 = vmatpush1.msra.mxu0 0.0
        %1311 = vmatprep.subr.mxu0 0.0
        %1312 = vmatpush1.msra.mxu0 0.0
        %1313 = vmatprep.mubr.f32.mxu0 0.0
        %1314 = vmatmul.mubr.f32.gmra.mrb[0].mxu0 %v1167
        %v1315 = vpop.f32.mrb[0].mxu0
        %v1316 = vadd.f32 0.0, %v1315
        %v1317 = vpop.f32.mrb[0].mxu0
        %1318 = vmatprep.mubr.f32.mxu0 0.0
        %1319 = vmatmul.mubr.f32.gmra.mrb[0].mxu0 %v1170
        %v1320 = vpop.f32.mrb[0].mxu0
        %v1321 = vadd.f32 0.0, %v1320
        %v1322 = vpop.f32.mrb[0].mxu0
        %1323 = vdwg.mxu0
        %v1324 = vadd.f32 %v1056, %v1239
        %v1325 = vadd.f32 %v1058, %v1241
        %v1326 = vadd.f32 %v1133, %v1316
        %v1327 = vadd.f32 %v1062, %v1245
        %v1328 = vadd.f32 %v1064, %v1247
        %v1329 = vadd.f32 %v1138, %v1321
        %s1330 = scalar_lea.vmem [#allocation6], 48
        %v1331 = vld [vmem:[%s1330] sm:$0xff]
        %v1332 = vld [vmem:[%s1330 + $0x8] sm:$0xff]
        %1333 = vrot.lane.b32.xlu0 %v785, 110
        %v1334 = vpop.permute.xlu0 %1333
        %1335 = vrot.lane.b32.xlu0 %v786, 110
        %v1336 = vpop.permute.xlu0 %1335
        %1337 = vrot.lane.b32.xlu0 %v787, 110
        %v1338 = vpop.permute.xlu0 %1337
        %1339 = vrot.lane.b32.xlu0 %v788, 110
        %v1340 = vpop.permute.xlu0 %1339
        %1341 = vrot.lane.b32.xlu0 %v789, 110
        %v1342 = vpop.permute.xlu0 %1341
        %1343 = vrot.lane.b32.xlu0 %v790, 110
        %v1344 = vpop.permute.xlu0 %1343
        %v1345 = vsel %vm438, %v1334, %v1336
        %v1346 = vsel %vm438, %v1336, %v1338
        %v1347 = vsel %vm438, %v1340, %v1342
        %v1348 = vsel %vm438, %v1342, %v1344
        %v1356 = vsel %vm824, %v1331, 0
        %v1359 = vsel %vm824, %v1332, 0
        %1361 = vmatprep.subr.mxu0 %v1346
        %1362 = vmatpush1.msra.mxu0 %v1345
        %1363 = vmatprep.subr.mxu0 %v1348
        %1364 = vmatpush1.msra.mxu0 %v1347
        %1365 = vmatprep.subr.mxu0 0.0
        %1366 = vmatpush1.msra.mxu0 0.0
        %1367 = vmatprep.subr.mxu0 0.0
        %1368 = vmatpush1.msra.mxu0 0.0
        %1369 = vmatprep.subr.mxu0 0.0
        %1370 = vmatpush1.msra.mxu0 0.0
        %1371 = vmatprep.subr.mxu0 0.0
        %1372 = vmatpush1.msra.mxu0 0.0
        %1373 = vmatprep.subr.mxu0 0.0
        %1374 = vmatpush1.msra.mxu0 0.0
        %1375 = vmatprep.subr.mxu0 0.0
        %1376 = vmatpush1.msra.mxu0 0.0
        %1377 = vmatprep.subr.mxu0 0.0
        %1378 = vmatpush1.msra.mxu0 0.0
        %1379 = vmatprep.subr.mxu0 0.0
        %1380 = vmatpush1.msra.mxu0 0.0
        %1381 = vmatprep.subr.mxu0 0.0
        %1382 = vmatpush1.msra.mxu0 0.0
        %1383 = vmatprep.subr.mxu0 0.0
        %1384 = vmatpush1.msra.mxu0 0.0
        %1385 = vmatprep.subr.mxu0 0.0
        %1386 = vmatpush1.msra.mxu0 0.0
        %1387 = vmatprep.subr.mxu0 0.0
        %1388 = vmatpush1.msra.mxu0 0.0
        %1389 = vmatprep.subr.mxu0 0.0
        %1390 = vmatpush1.msra.mxu0 0.0
        %1391 = vmatprep.subr.mxu0 0.0
        %1392 = vmatpush1.msra.mxu0 0.0
        %1393 = vmatprep.subr.mxu0 0.0
        %1394 = vmatpush1.msra.mxu0 0.0
        %1395 = vmatprep.subr.mxu0 0.0
        %1396 = vmatpush1.msra.mxu0 0.0
        %1397 = vmatprep.subr.mxu0 0.0
        %1398 = vmatpush1.msra.mxu0 0.0
        %1399 = vmatprep.subr.mxu0 0.0
        %1400 = vmatpush1.msra.mxu0 0.0
        %1401 = vmatprep.subr.mxu0 0.0
        %1402 = vmatpush1.msra.mxu0 0.0
        %1403 = vmatprep.subr.mxu0 0.0
        %1404 = vmatpush1.msra.mxu0 0.0
        %1405 = vmatprep.subr.mxu0 0.0
        %1406 = vmatpush1.msra.mxu0 0.0
        %1407 = vmatprep.subr.mxu0 0.0
        %1408 = vmatpush1.msra.mxu0 0.0
        %1409 = vmatprep.subr.mxu0 0.0
        %1410 = vmatpush1.msra.mxu0 0.0
        %1411 = vmatprep.subr.mxu0 0.0
        %1412 = vmatpush1.msra.mxu0 0.0
        %1413 = vmatprep.subr.mxu0 0.0
        %1414 = vmatpush1.msra.mxu0 0.0
        %1415 = vmatprep.subr.mxu0 0.0
        %1416 = vmatpush1.msra.mxu0 0.0
        %1417 = vmatprep.subr.mxu0 0.0
        %1418 = vmatpush1.msra.mxu0 0.0
        %1419 = vmatprep.subr.mxu0 0.0
        %1420 = vmatpush1.msra.mxu0 0.0
        %1421 = vmatprep.subr.mxu0 0.0
        %1422 = vmatpush1.msra.mxu0 0.0
        %1423 = vmatprep.subr.mxu0 0.0
        %1424 = vmatpush1.msra.mxu0 0.0
        %1425 = vmatprep.mubr.f32.mxu0 0.0
        %1426 = vmatmul.mubr.f32.gmra.mrb[0].mxu0 %v1356
        %v1427 = vpop.f32.mrb[0].mxu0
        %v1428 = vadd.f32 0.0, %v1427
        %v1429 = vpop.f32.mrb[0].mxu0
        %v1430 = vadd.f32 0.0, %v1429
        %1431 = vmatprep.mubr.f32.mxu0 0.0
        %1432 = vmatmul.mubr.f32.gmra.mrb[0].mxu0 %v1359
        %v1433 = vpop.f32.mrb[0].mxu0
        %v1434 = vadd.f32 0.0, %v1433
        %v1435 = vpop.f32.mrb[0].mxu0
        %v1436 = vadd.f32 0.0, %v1435
        %1437 = vdwg.mxu0
        %1438 = vmatprep.subr.mxu0 0.0
        %1439 = vmatpush1.msra.mxu0 %v1338
        %1440 = vmatprep.subr.mxu0 0.0
        %1441 = vmatpush1.msra.mxu0 %v1344
        %1442 = vmatprep.subr.mxu0 0.0
        %1443 = vmatpush1.msra.mxu0 0.0
        %1444 = vmatprep.subr.mxu0 0.0
        %1445 = vmatpush1.msra.mxu0 0.0
        %1446 = vmatprep.subr.mxu0 0.0
        %1447 = vmatpush1.msra.mxu0 0.0
        %1448 = vmatprep.subr.mxu0 0.0
        %1449 = vmatpush1.msra.mxu0 0.0
        %1450 = vmatprep.subr.mxu0 0.0
        %1451 = vmatpush1.msra.mxu0 0.0
        %1452 = vmatprep.subr.mxu0 0.0
        %1453 = vmatpush1.msra.mxu0 0.0
        %1454 = vmatprep.subr.mxu0 0.0
        %1455 = vmatpush1.msra.mxu0 0.0
        %1456 = vmatprep.subr.mxu0 0.0
        %1457 = vmatpush1.msra.mxu0 0.0
        %1458 = vmatprep.subr.mxu0 0.0
        %1459 = vmatpush1.msra.mxu0 0.0
        %1460 = vmatprep.subr.mxu0 0.0
        %1461 = vmatpush1.msra.mxu0 0.0
        %1462 = vmatprep.subr.mxu0 0.0
        %1463 = vmatpush1.msra.mxu0 0.0
        %1464 = vmatprep.subr.mxu0 0.0
        %1465 = vmatpush1.msra.mxu0 0.0
        %1466 = vmatprep.subr.mxu0 0.0
        %1467 = vmatpush1.msra.mxu0 0.0
        %1468 = vmatprep.subr.mxu0 0.0
        %1469 = vmatpush1.msra.mxu0 0.0
        %1470 = vmatprep.subr.mxu0 0.0
        %1471 = vmatpush1.msra.mxu0 0.0
        %1472 = vmatprep.subr.mxu0 0.0
        %1473 = vmatpush1.msra.mxu0 0.0
        %1474 = vmatprep.subr.mxu0 0.0
        %1475 = vmatpush1.msra.mxu0 0.0
        %1476 = vmatprep.subr.mxu0 0.0
        %1477 = vmatpush1.msra.mxu0 0.0
        %1478 = vmatprep.subr.mxu0 0.0
        %1479 = vmatpush1.msra.mxu0 0.0
        %1480 = vmatprep.subr.mxu0 0.0
        %1481 = vmatpush1.msra.mxu0 0.0
        %1482 = vmatprep.subr.mxu0 0.0
        %1483 = vmatpush1.msra.mxu0 0.0
        %1484 = vmatprep.subr.mxu0 0.0
        %1485 = vmatpush1.msra.mxu0 0.0
        %1486 = vmatprep.subr.mxu0 0.0
        %1487 = vmatpush1.msra.mxu0 0.0
        %1488 = vmatprep.subr.mxu0 0.0
        %1489 = vmatpush1.msra.mxu0 0.0
        %1490 = vmatprep.subr.mxu0 0.0
        %1491 = vmatpush1.msra.mxu0 0.0
        %1492 = vmatprep.subr.mxu0 0.0
        %1493 = vmatpush1.msra.mxu0 0.0
        %1494 = vmatprep.subr.mxu0 0.0
        %1495 = vmatpush1.msra.mxu0 0.0
        %1496 = vmatprep.subr.mxu0 0.0
        %1497 = vmatpush1.msra.mxu0 0.0
        %1498 = vmatprep.subr.mxu0 0.0
        %1499 = vmatpush1.msra.mxu0 0.0
        %1500 = vmatprep.subr.mxu0 0.0
        %1501 = vmatpush1.msra.mxu0 0.0
        %1502 = vmatprep.mubr.f32.mxu0 0.0
        %1503 = vmatmul.mubr.f32.gmra.mrb[0].mxu0 %v1356
        %v1504 = vpop.f32.mrb[0].mxu0
        %v1505 = vadd.f32 0.0, %v1504
        %v1506 = vpop.f32.mrb[0].mxu0
        %1507 = vmatprep.mubr.f32.mxu0 0.0
        %1508 = vmatmul.mubr.f32.gmra.mrb[0].mxu0 %v1359
        %v1509 = vpop.f32.mrb[0].mxu0
        %v1510 = vadd.f32 0.0, %v1509
        %v1511 = vpop.f32.mrb[0].mxu0
        %1512 = vdwg.mxu0
        %v1513 = vadd.f32 %v1324, %v1428
        %v1514 = vadd.f32 %v1325, %v1430
        %v1515 = vadd.f32 %v1326, %v1505
        %v1516 = vadd.f32 %v1327, %v1434
        %v1517 = vadd.f32 %v1328, %v1436
        %v1518 = vadd.f32 %v1329, %v1510
        %s1519 = scalar_lea.vmem [#allocation6], 64
        %v1520 = vld [vmem:[%s1519] sm:$0xff]
        %v1521 = vld [vmem:[%s1519 + $0x8] sm:$0xff]
        %1522 = vrot.lane.b32.xlu0 %v785, 109
        %v1523 = vpop.permute.xlu0 %1522
        %1524 = vrot.lane.b32.xlu0 %v786, 109
        %v1525 = vpop.permute.xlu0 %1524
        %1526 = vrot.lane.b32.xlu0 %v787, 109
        %v1527 = vpop.permute.xlu0 %1526
        %1528 = vrot.lane.b32.xlu0 %v788, 109
        %v1529 = vpop.permute.xlu0 %1528
        %1530 = vrot.lane.b32.xlu0 %v789, 109
        %v1531 = vpop.permute.xlu0 %1530
        %1532 = vrot.lane.b32.xlu0 %v790, 109
        %v1533 = vpop.permute.xlu0 %1532
        %v1534 = vsel %vm487, %v1523, %v1525
        %v1535 = vsel %vm487, %v1525, %v1527
        %v1536 = vsel %vm487, %v1529, %v1531
        %v1537 = vsel %vm487, %v1531, %v1533
        %v1545 = vsel %vm824, %v1520, 0
        %v1548 = vsel %vm824, %v1521, 0
        %1550 = vmatprep.subr.mxu0 %v1535
        %1551 = vmatpush1.msra.mxu0 %v1534
        %1552 = vmatprep.subr.mxu0 %v1537
        %1553 = vmatpush1.msra.mxu0 %v1536
        %1554 = vmatprep.subr.mxu0 0.0
        %1555 = vmatpush1.msra.mxu0 0.0
        %1556 = vmatprep.subr.mxu0 0.0
        %1557 = vmatpush1.msra.mxu0 0.0
        %1558 = vmatprep.subr.mxu0 0.0
        %1559 = vmatpush1.msra.mxu0 0.0
        %1560 = vmatprep.subr.mxu0 0.0
        %1561 = vmatpush1.msra.mxu0 0.0
        %1562 = vmatprep.subr.mxu0 0.0
        %1563 = vmatpush1.msra.mxu0 0.0
        %1564 = vmatprep.subr.mxu0 0.0
        %1565 = vmatpush1.msra.mxu0 0.0
        %1566 = vmatprep.subr.mxu0 0.0
        %1567 = vmatpush1.msra.mxu0 0.0
        %1568 = vmatprep.subr.mxu0 0.0
        %1569 = vmatpush1.msra.mxu0 0.0
        %1570 = vmatprep.subr.mxu0 0.0
        %1571 = vmatpush1.msra.mxu0 0.0
        %1572 = vmatprep.subr.mxu0 0.0
        %1573 = vmatpush1.msra.mxu0 0.0
        %1574 = vmatprep.subr.mxu0 0.0
        %1575 = vmatpush1.msra.mxu0 0.0
        %1576 = vmatprep.subr.mxu0 0.0
        %1577 = vmatpush1.msra.mxu0 0.0
        %1578 = vmatprep.subr.mxu0 0.0
        %1579 = vmatpush1.msra.mxu0 0.0
        %1580 = vmatprep.subr.mxu0 0.0
        %1581 = vmatpush1.msra.mxu0 0.0
        %1582 = vmatprep.subr.mxu0 0.0
        %1583 = vmatpush1.msra.mxu0 0.0
        %1584 = vmatprep.subr.mxu0 0.0
        %1585 = vmatpush1.msra.mxu0 0.0
        %1586 = vmatprep.subr.mxu0 0.0
        %1587 = vmatpush1.msra.mxu0 0.0
        %1588 = vmatprep.subr.mxu0 0.0
        %1589 = vmatpush1.msra.mxu0 0.0
        %1590 = vmatprep.subr.mxu0 0.0
        %1591 = vmatpush1.msra.mxu0 0.0
        %1592 = vmatprep.subr.mxu0 0.0
        %1593 = vmatpush1.msra.mxu0 0.0
        %1594 = vmatprep.subr.mxu0 0.0
        %1595 = vmatpush1.msra.mxu0 0.0
        %1596 = vmatprep.subr.mxu0 0.0
        %1597 = vmatpush1.msra.mxu0 0.0
        %1598 = vmatprep.subr.mxu0 0.0
        %1599 = vmatpush1.msra.mxu0 0.0
        %1600 = vmatprep.subr.mxu0 0.0
        %1601 = vmatpush1.msra.mxu0 0.0
        %1602 = vmatprep.subr.mxu0 0.0
        %1603 = vmatpush1.msra.mxu0 0.0
        %1604 = vmatprep.subr.mxu0 0.0
        %1605 = vmatpush1.msra.mxu0 0.0
        %1606 = vmatprep.subr.mxu0 0.0
        %1607 = vmatpush1.msra.mxu0 0.0
        %1608 = vmatprep.subr.mxu0 0.0
        %1609 = vmatpush1.msra.mxu0 0.0
        %1610 = vmatprep.subr.mxu0 0.0
        %1611 = vmatpush1.msra.mxu0 0.0
        %1612 = vmatprep.subr.mxu0 0.0
        %1613 = vmatpush1.msra.mxu0 0.0
        %1614 = vmatprep.mubr.f32.mxu0 0.0
        %1615 = vmatmul.mubr.f32.gmra.mrb[0].mxu0 %v1545
        %v1616 = vpop.f32.mrb[0].mxu0
        %v1617 = vadd.f32 0.0, %v1616
        %v1618 = vpop.f32.mrb[0].mxu0
        %v1619 = vadd.f32 0.0, %v1618
        %1620 = vmatprep.mubr.f32.mxu0 0.0
        %1621 = vmatmul.mubr.f32.gmra.mrb[0].mxu0 %v1548
        %v1622 = vpop.f32.mrb[0].mxu0
        %v1623 = vadd.f32 0.0, %v1622
        %v1624 = vpop.f32.mrb[0].mxu0
        %v1625 = vadd.f32 0.0, %v1624
        %1626 = vdwg.mxu0
        %1627 = vmatprep.subr.mxu0 0.0
        %1628 = vmatpush1.msra.mxu0 %v1527
        %1629 = vmatprep.subr.mxu0 0.0
        %1630 = vmatpush1.msra.mxu0 %v1533
        %1631 = vmatprep.subr.mxu0 0.0
        %1632 = vmatpush1.msra.mxu0 0.0
        %1633 = vmatprep.subr.mxu0 0.0
        %1634 = vmatpush1.msra.mxu0 0.0
        %1635 = vmatprep.subr.mxu0 0.0
        %1636 = vmatpush1.msra.mxu0 0.0
        %1637 = vmatprep.subr.mxu0 0.0
        %1638 = vmatpush1.msra.mxu0 0.0
        %1639 = vmatprep.subr.mxu0 0.0
        %1640 = vmatpush1.msra.mxu0 0.0
        %1641 = vmatprep.subr.mxu0 0.0
        %1642 = vmatpush1.msra.mxu0 0.0
        %1643 = vmatprep.subr.mxu0 0.0
        %1644 = vmatpush1.msra.mxu0 0.0
        %1645 = vmatprep.subr.mxu0 0.0
        %1646 = vmatpush1.msra.mxu0 0.0
        %1647 = vmatprep.subr.mxu0 0.0
        %1648 = vmatpush1.msra.mxu0 0.0
        %1649 = vmatprep.subr.mxu0 0.0
        %1650 = vmatpush1.msra.mxu0 0.0
        %1651 = vmatprep.subr.mxu0 0.0
        %1652 = vmatpush1.msra.mxu0 0.0
        %1653 = vmatprep.subr.mxu0 0.0
        %1654 = vmatpush1.msra.mxu0 0.0
        %1655 = vmatprep.subr.mxu0 0.0
        %1656 = vmatpush1.msra.mxu0 0.0
        %1657 = vmatprep.subr.mxu0 0.0
        %1658 = vmatpush1.msra.mxu0 0.0
        %1659 = vmatprep.subr.mxu0 0.0
        %1660 = vmatpush1.msra.mxu0 0.0
        %1661 = vmatprep.subr.mxu0 0.0
        %1662 = vmatpush1.msra.mxu0 0.0
        %1663 = vmatprep.subr.mxu0 0.0
        %1664 = vmatpush1.msra.mxu0 0.0
        %1665 = vmatprep.subr.mxu0 0.0
        %1666 = vmatpush1.msra.mxu0 0.0
        %1667 = vmatprep.subr.mxu0 0.0
        %1668 = vmatpush1.msra.mxu0 0.0
        %1669 = vmatprep.subr.mxu0 0.0
        %1670 = vmatpush1.msra.mxu0 0.0
        %1671 = vmatprep.subr.mxu0 0.0
        %1672 = vmatpush1.msra.mxu0 0.0
        %1673 = vmatprep.subr.mxu0 0.0
        %1674 = vmatpush1.msra.mxu0 0.0
        %1675 = vmatprep.subr.mxu0 0.0
        %1676 = vmatpush1.msra.mxu0 0.0
        %1677 = vmatprep.subr.mxu0 0.0
        %1678 = vmatpush1.msra.mxu0 0.0
        %1679 = vmatprep.subr.mxu0 0.0
        %1680 = vmatpush1.msra.mxu0 0.0
        %1681 = vmatprep.subr.mxu0 0.0
        %1682 = vmatpush1.msra.mxu0 0.0
        %1683 = vmatprep.subr.mxu0 0.0
        %1684 = vmatpush1.msra.mxu0 0.0
        %1685 = vmatprep.subr.mxu0 0.0
        %1686 = vmatpush1.msra.mxu0 0.0
        %1687 = vmatprep.subr.mxu0 0.0
        %1688 = vmatpush1.msra.mxu0 0.0
        %1689 = vmatprep.subr.mxu0 0.0
        %1690 = vmatpush1.msra.mxu0 0.0
        %1691 = vmatprep.mubr.f32.mxu0 0.0
        %1692 = vmatmul.mubr.f32.gmra.mrb[0].mxu0 %v1545
        %v1693 = vpop.f32.mrb[0].mxu0
        %v1694 = vadd.f32 0.0, %v1693
        %v1695 = vpop.f32.mrb[0].mxu0
        %1696 = vmatprep.mubr.f32.mxu0 0.0
        %1697 = vmatmul.mubr.f32.gmra.mrb[0].mxu0 %v1548
        %v1698 = vpop.f32.mrb[0].mxu0
        %v1699 = vadd.f32 0.0, %v1698
        %v1700 = vpop.f32.mrb[0].mxu0
        %1701 = vdwg.mxu0
        %v1702 = vadd.f32 %v1513, %v1617
        %v1703 = vadd.f32 %v1514, %v1619
        %v1704 = vadd.f32 %v1515, %v1694
        %v1705 = vadd.f32 %v1516, %v1623
        %v1706 = vadd.f32 %v1517, %v1625
        %v1707 = vadd.f32 %v1518, %v1699
        %s1708 = scalar_lea.vmem [#allocation6], 80
        %v1709 = vld [vmem:[%s1708] sm:$0xff]
        %v1710 = vld [vmem:[%s1708 + $0x8] sm:$0xff]
        %1711 = vrot.lane.b32.xlu0 %v785, 108
        %v1712 = vpop.permute.xlu0 %1711
        %1713 = vrot.lane.b32.xlu0 %v786, 108
        %v1714 = vpop.permute.xlu0 %1713
        %1715 = vrot.lane.b32.xlu0 %v787, 108
        %v1716 = vpop.permute.xlu0 %1715
        %1717 = vrot.lane.b32.xlu0 %v788, 108
        %v1718 = vpop.permute.xlu0 %1717
        %1719 = vrot.lane.b32.xlu0 %v789, 108
        %v1720 = vpop.permute.xlu0 %1719
        %1721 = vrot.lane.b32.xlu0 %v790, 108
        %v1722 = vpop.permute.xlu0 %1721
        %v1723 = vsel %vm536, %v1712, %v1714
        %v1724 = vsel %vm536, %v1714, %v1716
        %v1725 = vsel %vm536, %v1718, %v1720
        %v1726 = vsel %vm536, %v1720, %v1722
        %v1734 = vsel %vm824, %v1709, 0
        %v1737 = vsel %vm824, %v1710, 0
        %1739 = vmatprep.subr.mxu0 %v1724
        %1740 = vmatpush1.msra.mxu0 %v1723
        %1741 = vmatprep.subr.mxu0 %v1726
        %1742 = vmatpush1.msra.mxu0 %v1725
        %1743 = vmatprep.subr.mxu0 0.0
        %1744 = vmatpush1.msra.mxu0 0.0
        %1745 = vmatprep.subr.mxu0 0.0
        %1746 = vmatpush1.msra.mxu0 0.0
        %1747 = vmatprep.subr.mxu0 0.0
        %1748 = vmatpush1.msra.mxu0 0.0
        %1749 = vmatprep.subr.mxu0 0.0
        %1750 = vmatpush1.msra.mxu0 0.0
        %1751 = vmatprep.subr.mxu0 0.0
        %1752 = vmatpush1.msra.mxu0 0.0
        %1753 = vmatprep.subr.mxu0 0.0
        %1754 = vmatpush1.msra.mxu0 0.0
        %1755 = vmatprep.subr.mxu0 0.0
        %1756 = vmatpush1.msra.mxu0 0.0
        %1757 = vmatprep.subr.mxu0 0.0
        %1758 = vmatpush1.msra.mxu0 0.0
        %1759 = vmatprep.subr.mxu0 0.0
        %1760 = vmatpush1.msra.mxu0 0.0
        %1761 = vmatprep.subr.mxu0 0.0
        %1762 = vmatpush1.msra.mxu0 0.0
        %1763 = vmatprep.subr.mxu0 0.0
        %1764 = vmatpush1.msra.mxu0 0.0
        %1765 = vmatprep.subr.mxu0 0.0
        %1766 = vmatpush1.msra.mxu0 0.0
        %1767 = vmatprep.subr.mxu0 0.0
        %1768 = vmatpush1.msra.mxu0 0.0
        %1769 = vmatprep.subr.mxu0 0.0
        %1770 = vmatpush1.msra.mxu0 0.0
        %1771 = vmatprep.subr.mxu0 0.0
        %1772 = vmatpush1.msra.mxu0 0.0
        %1773 = vmatprep.subr.mxu0 0.0
        %1774 = vmatpush1.msra.mxu0 0.0
        %1775 = vmatprep.subr.mxu0 0.0
        %1776 = vmatpush1.msra.mxu0 0.0
        %1777 = vmatprep.subr.mxu0 0.0
        %1778 = vmatpush1.msra.mxu0 0.0
        %1779 = vmatprep.subr.mxu0 0.0
        %1780 = vmatpush1.msra.mxu0 0.0
        %1781 = vmatprep.subr.mxu0 0.0
        %1782 = vmatpush1.msra.mxu0 0.0
        %1783 = vmatprep.subr.mxu0 0.0
        %1784 = vmatpush1.msra.mxu0 0.0
        %1785 = vmatprep.subr.mxu0 0.0
        %1786 = vmatpush1.msra.mxu0 0.0
        %1787 = vmatprep.subr.mxu0 0.0
        %1788 = vmatpush1.msra.mxu0 0.0
        %1789 = vmatprep.subr.mxu0 0.0
        %1790 = vmatpush1.msra.mxu0 0.0
        %1791 = vmatprep.subr.mxu0 0.0
        %1792 = vmatpush1.msra.mxu0 0.0
        %1793 = vmatprep.subr.mxu0 0.0
        %1794 = vmatpush1.msra.mxu0 0.0
        %1795 = vmatprep.subr.mxu0 0.0
        %1796 = vmatpush1.msra.mxu0 0.0
        %1797 = vmatprep.subr.mxu0 0.0
        %1798 = vmatpush1.msra.mxu0 0.0
        %1799 = vmatprep.subr.mxu0 0.0
        %1800 = vmatpush1.msra.mxu0 0.0
        %1801 = vmatprep.subr.mxu0 0.0
        %1802 = vmatpush1.msra.mxu0 0.0
        %1803 = vmatprep.mubr.f32.mxu0 0.0
        %1804 = vmatmul.mubr.f32.gmra.mrb[0].mxu0 %v1734
        %v1805 = vpop.f32.mrb[0].mxu0
        %v1806 = vadd.f32 0.0, %v1805
        %v1807 = vpop.f32.mrb[0].mxu0
        %v1808 = vadd.f32 0.0, %v1807
        %1809 = vmatprep.mubr.f32.mxu0 0.0
        %1810 = vmatmul.mubr.f32.gmra.mrb[0].mxu0 %v1737
        %v1811 = vpop.f32.mrb[0].mxu0
        %v1812 = vadd.f32 0.0, %v1811
        %v1813 = vpop.f32.mrb[0].mxu0
        %v1814 = vadd.f32 0.0, %v1813
        %1815 = vdwg.mxu0
        %1816 = vmatprep.subr.mxu0 0.0
        %1817 = vmatpush1.msra.mxu0 %v1716
        %1818 = vmatprep.subr.mxu0 0.0
        %1819 = vmatpush1.msra.mxu0 %v1722
        %1820 = vmatprep.subr.mxu0 0.0
        %1821 = vmatpush1.msra.mxu0 0.0
        %1822 = vmatprep.subr.mxu0 0.0
        %1823 = vmatpush1.msra.mxu0 0.0
        %1824 = vmatprep.subr.mxu0 0.0
        %1825 = vmatpush1.msra.mxu0 0.0
        %1826 = vmatprep.subr.mxu0 0.0
        %1827 = vmatpush1.msra.mxu0 0.0
        %1828 = vmatprep.subr.mxu0 0.0
        %1829 = vmatpush1.msra.mxu0 0.0
        %1830 = vmatprep.subr.mxu0 0.0
        %1831 = vmatpush1.msra.mxu0 0.0
        %1832 = vmatprep.subr.mxu0 0.0
        %1833 = vmatpush1.msra.mxu0 0.0
        %1834 = vmatprep.subr.mxu0 0.0
        %1835 = vmatpush1.msra.mxu0 0.0
        %1836 = vmatprep.subr.mxu0 0.0
        %1837 = vmatpush1.msra.mxu0 0.0
        %1838 = vmatprep.subr.mxu0 0.0
        %1839 = vmatpush1.msra.mxu0 0.0
        %1840 = vmatprep.subr.mxu0 0.0
        %1841 = vmatpush1.msra.mxu0 0.0
        %1842 = vmatprep.subr.mxu0 0.0
        %1843 = vmatpush1.msra.mxu0 0.0
        %1844 = vmatprep.subr.mxu0 0.0
        %1845 = vmatpush1.msra.mxu0 0.0
        %1846 = vmatprep.subr.mxu0 0.0
        %1847 = vmatpush1.msra.mxu0 0.0
        %1848 = vmatprep.subr.mxu0 0.0
        %1849 = vmatpush1.msra.mxu0 0.0
        %1850 = vmatprep.subr.mxu0 0.0
        %1851 = vmatpush1.msra.mxu0 0.0
        %1852 = vmatprep.subr.mxu0 0.0
        %1853 = vmatpush1.msra.mxu0 0.0
        %1854 = vmatprep.subr.mxu0 0.0
        %1855 = vmatpush1.msra.mxu0 0.0
        %1856 = vmatprep.subr.mxu0 0.0
        %1857 = vmatpush1.msra.mxu0 0.0
        %1858 = vmatprep.subr.mxu0 0.0
        %1859 = vmatpush1.msra.mxu0 0.0
        %1860 = vmatprep.subr.mxu0 0.0
        %1861 = vmatpush1.msra.mxu0 0.0
        %1862 = vmatprep.subr.mxu0 0.0
        %1863 = vmatpush1.msra.mxu0 0.0
        %1864 = vmatprep.subr.mxu0 0.0
        %1865 = vmatpush1.msra.mxu0 0.0
        %1866 = vmatprep.subr.mxu0 0.0
        %1867 = vmatpush1.msra.mxu0 0.0
        %1868 = vmatprep.subr.mxu0 0.0
        %1869 = vmatpush1.msra.mxu0 0.0
        %1870 = vmatprep.subr.mxu0 0.0
        %1871 = vmatpush1.msra.mxu0 0.0
        %1872 = vmatprep.subr.mxu0 0.0
        %1873 = vmatpush1.msra.mxu0 0.0
        %1874 = vmatprep.subr.mxu0 0.0
        %1875 = vmatpush1.msra.mxu0 0.0
        %1876 = vmatprep.subr.mxu0 0.0
        %1877 = vmatpush1.msra.mxu0 0.0
        %1878 = vmatprep.subr.mxu0 0.0
        %1879 = vmatpush1.msra.mxu0 0.0
        %1880 = vmatprep.mubr.f32.mxu0 0.0
        %1881 = vmatmul.mubr.f32.gmra.mrb[0].mxu0 %v1734
        %v1882 = vpop.f32.mrb[0].mxu0
        %v1883 = vadd.f32 0.0, %v1882
        %v1884 = vpop.f32.mrb[0].mxu0
        %1885 = vmatprep.mubr.f32.mxu0 0.0
        %1886 = vmatmul.mubr.f32.gmra.mrb[0].mxu0 %v1737
        %v1887 = vpop.f32.mrb[0].mxu0
        %v1888 = vadd.f32 0.0, %v1887
        %v1889 = vpop.f32.mrb[0].mxu0
        %1890 = vdwg.mxu0
        %v1891 = vadd.f32 %v1702, %v1806
        %v1892 = vadd.f32 %v1703, %v1808
        %v1893 = vadd.f32 %v1704, %v1883
        %v1894 = vadd.f32 %v1705, %v1812
        %v1895 = vadd.f32 %v1706, %v1814
        %v1896 = vadd.f32 %v1707, %v1888
        %s1897 = scalar_lea.vmem [#allocation6], 96
        %v1898 = vld [vmem:[%s1897] sm:$0xff]
        %v1899 = vld [vmem:[%s1897 + $0x8] sm:$0xff]
        %1900 = vrot.lane.b32.xlu0 %v785, 92
        %v1901 = vpop.permute.xlu0 %1900
        %1902 = vrot.lane.b32.xlu0 %v786, 92
        %v1903 = vpop.permute.xlu0 %1902
        %1904 = vrot.lane.b32.xlu0 %v787, 92
        %v1905 = vpop.permute.xlu0 %1904
        %1906 = vrot.lane.b32.xlu0 %v788, 92
        %v1907 = vpop.permute.xlu0 %1906
        %1908 = vrot.lane.b32.xlu0 %v789, 92
        %v1909 = vpop.permute.xlu0 %1908
        %1910 = vrot.lane.b32.xlu0 %v790, 92
        %v1911 = vpop.permute.xlu0 %1910
        %v1912 = vsel %vm585, %v1901, %v1903
        %v1913 = vsel %vm585, %v1903, %v1905
        %v1914 = vsel %vm585, %v1907, %v1909
        %v1915 = vsel %vm585, %v1909, %v1911
        %v1923 = vsel %vm824, %v1898, 0
        %v1926 = vsel %vm824, %v1899, 0
        %1928 = vmatprep.subr.mxu0 %v1913
        %1929 = vmatpush1.msra.mxu0 %v1912
        %1930 = vmatprep.subr.mxu0 %v1915
        %1931 = vmatpush1.msra.mxu0 %v1914
        %1932 = vmatprep.subr.mxu0 0.0
        %1933 = vmatpush1.msra.mxu0 0.0
        %1934 = vmatprep.subr.mxu0 0.0
        %1935 = vmatpush1.msra.mxu0 0.0
        %1936 = vmatprep.subr.mxu0 0.0
        %1937 = vmatpush1.msra.mxu0 0.0
        %1938 = vmatprep.subr.mxu0 0.0
        %1939 = vmatpush1.msra.mxu0 0.0
        %1940 = vmatprep.subr.mxu0 0.0
        %1941 = vmatpush1.msra.mxu0 0.0
        %1942 = vmatprep.subr.mxu0 0.0
        %1943 = vmatpush1.msra.mxu0 0.0
        %1944 = vmatprep.subr.mxu0 0.0
        %1945 = vmatpush1.msra.mxu0 0.0
        %1946 = vmatprep.subr.mxu0 0.0
        %1947 = vmatpush1.msra.mxu0 0.0
        %1948 = vmatprep.subr.mxu0 0.0
        %1949 = vmatpush1.msra.mxu0 0.0
        %1950 = vmatprep.subr.mxu0 0.0
        %1951 = vmatpush1.msra.mxu0 0.0
        %1952 = vmatprep.subr.mxu0 0.0
        %1953 = vmatpush1.msra.mxu0 0.0
        %1954 = vmatprep.subr.mxu0 0.0
        %1955 = vmatpush1.msra.mxu0 0.0
        %1956 = vmatprep.subr.mxu0 0.0
        %1957 = vmatpush1.msra.mxu0 0.0
        %1958 = vmatprep.subr.mxu0 0.0
        %1959 = vmatpush1.msra.mxu0 0.0
        %1960 = vmatprep.subr.mxu0 0.0
        %1961 = vmatpush1.msra.mxu0 0.0
        %1962 = vmatprep.subr.mxu0 0.0
        %1963 = vmatpush1.msra.mxu0 0.0
        %1964 = vmatprep.subr.mxu0 0.0
        %1965 = vmatpush1.msra.mxu0 0.0
        %1966 = vmatprep.subr.mxu0 0.0
        %1967 = vmatpush1.msra.mxu0 0.0
        %1968 = vmatprep.subr.mxu0 0.0
        %1969 = vmatpush1.msra.mxu0 0.0
        %1970 = vmatprep.subr.mxu0 0.0
        %1971 = vmatpush1.msra.mxu0 0.0
        %1972 = vmatprep.subr.mxu0 0.0
        %1973 = vmatpush1.msra.mxu0 0.0
        %1974 = vmatprep.subr.mxu0 0.0
        %1975 = vmatpush1.msra.mxu0 0.0
        %1976 = vmatprep.subr.mxu0 0.0
        %1977 = vmatpush1.msra.mxu0 0.0
        %1978 = vmatprep.subr.mxu0 0.0
        %1979 = vmatpush1.msra.mxu0 0.0
        %1980 = vmatprep.subr.mxu0 0.0
        %1981 = vmatpush1.msra.mxu0 0.0
        %1982 = vmatprep.subr.mxu0 0.0
        %1983 = vmatpush1.msra.mxu0 0.0
        %1984 = vmatprep.subr.mxu0 0.0
        %1985 = vmatpush1.msra.mxu0 0.0
        %1986 = vmatprep.subr.mxu0 0.0
        %1987 = vmatpush1.msra.mxu0 0.0
        %1988 = vmatprep.subr.mxu0 0.0
        %1989 = vmatpush1.msra.mxu0 0.0
        %1990 = vmatprep.subr.mxu0 0.0
        %1991 = vmatpush1.msra.mxu0 0.0
        %1992 = vmatprep.mubr.f32.mxu0 0.0
        %1993 = vmatmul.mubr.f32.gmra.mrb[0].mxu0 %v1923
        %v1994 = vpop.f32.mrb[0].mxu0
        %v1995 = vadd.f32 0.0, %v1994
        %v1996 = vpop.f32.mrb[0].mxu0
        %v1997 = vadd.f32 0.0, %v1996
        %1998 = vmatprep.mubr.f32.mxu0 0.0
        %1999 = vmatmul.mubr.f32.gmra.mrb[0].mxu0 %v1926
        %v2000 = vpop.f32.mrb[0].mxu0
        %v2001 = vadd.f32 0.0, %v2000
        %v2002 = vpop.f32.mrb[0].mxu0
        %v2003 = vadd.f32 0.0, %v2002
        %2004 = vdwg.mxu0
        %2005 = vmatprep.subr.mxu0 0.0
        %2006 = vmatpush1.msra.mxu0 %v1905
        %2007 = vmatprep.subr.mxu0 0.0
        %2008 = vmatpush1.msra.mxu0 %v1911
        %2009 = vmatprep.subr.mxu0 0.0
        %2010 = vmatpush1.msra.mxu0 0.0
        %2011 = vmatprep.subr.mxu0 0.0
        %2012 = vmatpush1.msra.mxu0 0.0
        %2013 = vmatprep.subr.mxu0 0.0
        %2014 = vmatpush1.msra.mxu0 0.0
        %2015 = vmatprep.subr.mxu0 0.0
        %2016 = vmatpush1.msra.mxu0 0.0
        %2017 = vmatprep.subr.mxu0 0.0
        %2018 = vmatpush1.msra.mxu0 0.0
        %2019 = vmatprep.subr.mxu0 0.0
        %2020 = vmatpush1.msra.mxu0 0.0
        %2021 = vmatprep.subr.mxu0 0.0
        %2022 = vmatpush1.msra.mxu0 0.0
        %2023 = vmatprep.subr.mxu0 0.0
        %2024 = vmatpush1.msra.mxu0 0.0
        %2025 = vmatprep.subr.mxu0 0.0
        %2026 = vmatpush1.msra.mxu0 0.0
        %2027 = vmatprep.subr.mxu0 0.0
        %2028 = vmatpush1.msra.mxu0 0.0
        %2029 = vmatprep.subr.mxu0 0.0
        %2030 = vmatpush1.msra.mxu0 0.0
        %2031 = vmatprep.subr.mxu0 0.0
        %2032 = vmatpush1.msra.mxu0 0.0
        %2033 = vmatprep.subr.mxu0 0.0
        %2034 = vmatpush1.msra.mxu0 0.0
        %2035 = vmatprep.subr.mxu0 0.0
        %2036 = vmatpush1.msra.mxu0 0.0
        %2037 = vmatprep.subr.mxu0 0.0
        %2038 = vmatpush1.msra.mxu0 0.0
        %2039 = vmatprep.subr.mxu0 0.0
        %2040 = vmatpush1.msra.mxu0 0.0
        %2041 = vmatprep.subr.mxu0 0.0
        %2042 = vmatpush1.msra.mxu0 0.0
        %2043 = vmatprep.subr.mxu0 0.0
        %2044 = vmatpush1.msra.mxu0 0.0
        %2045 = vmatprep.subr.mxu0 0.0
        %2046 = vmatpush1.msra.mxu0 0.0
        %2047 = vmatprep.subr.mxu0 0.0
        %2048 = vmatpush1.msra.mxu0 0.0
        %2049 = vmatprep.subr.mxu0 0.0
        %2050 = vmatpush1.msra.mxu0 0.0
        %2051 = vmatprep.subr.mxu0 0.0
        %2052 = vmatpush1.msra.mxu0 0.0
        %2053 = vmatprep.subr.mxu0 0.0
        %2054 = vmatpush1.msra.mxu0 0.0
        %2055 = vmatprep.subr.mxu0 0.0
        %2056 = vmatpush1.msra.mxu0 0.0
        %2057 = vmatprep.subr.mxu0 0.0
        %2058 = vmatpush1.msra.mxu0 0.0
        %2059 = vmatprep.subr.mxu0 0.0
        %2060 = vmatpush1.msra.mxu0 0.0
        %2061 = vmatprep.subr.mxu0 0.0
        %2062 = vmatpush1.msra.mxu0 0.0
        %2063 = vmatprep.subr.mxu0 0.0
        %2064 = vmatpush1.msra.mxu0 0.0
        %2065 = vmatprep.subr.mxu0 0.0
        %2066 = vmatpush1.msra.mxu0 0.0
        %2067 = vmatprep.subr.mxu0 0.0
        %2068 = vmatpush1.msra.mxu0 0.0
        %2069 = vmatprep.mubr.f32.mxu0 0.0
        %2070 = vmatmul.mubr.f32.gmra.mrb[0].mxu0 %v1923
        %v2071 = vpop.f32.mrb[0].mxu0
        %v2072 = vadd.f32 0.0, %v2071
        %v2073 = vpop.f32.mrb[0].mxu0
        %2074 = vmatprep.mubr.f32.mxu0 0.0
        %2075 = vmatmul.mubr.f32.gmra.mrb[0].mxu0 %v1926
        %v2076 = vpop.f32.mrb[0].mxu0
        %v2077 = vadd.f32 0.0, %v2076
        %v2078 = vpop.f32.mrb[0].mxu0
        %2079 = vdwg.mxu0
        %v2080 = vadd.f32 %v1891, %v1995
        %v2081 = vadd.f32 %v1892, %v1997
        %v2082 = vadd.f32 %v1893, %v2072
        %v2083 = vadd.f32 %v1894, %v2001
        %v2084 = vadd.f32 %v1895, %v2003
        %v2085 = vadd.f32 %v1896, %v2077
        %s2086 = scalar_lea.vmem [#allocation6], 112
        %v2087 = vld [vmem:[%s2086] sm:$0xff]
        %v2088 = vld [vmem:[%s2086 + $0x8] sm:$0xff]
        %2089 = vrot.lane.b32.xlu0 %v785, 91
        %v2090 = vpop.permute.xlu0 %2089
        %2091 = vrot.lane.b32.xlu0 %v786, 91
        %v2092 = vpop.permute.xlu0 %2091
        %2093 = vrot.lane.b32.xlu0 %v787, 91
        %v2094 = vpop.permute.xlu0 %2093
        %2095 = vrot.lane.b32.xlu0 %v788, 91
        %v2096 = vpop.permute.xlu0 %2095
        %2097 = vrot.lane.b32.xlu0 %v789, 91
        %v2098 = vpop.permute.xlu0 %2097
        %2099 = vrot.lane.b32.xlu0 %v790, 91
        %v2100 = vpop.permute.xlu0 %2099
        %v2101 = vsel %vm634, %v2090, %v2092
        %v2102 = vsel %vm634, %v2092, %v2094
        %v2103 = vsel %vm634, %v2096, %v2098
        %v2104 = vsel %vm634, %v2098, %v2100
        %v2112 = vsel %vm824, %v2087, 0
        %v2115 = vsel %vm824, %v2088, 0
        %2117 = vmatprep.subr.mxu0 %v2102
        %2118 = vmatpush1.msra.mxu0 %v2101
        %2119 = vmatprep.subr.mxu0 %v2104
        %2120 = vmatpush1.msra.mxu0 %v2103
        %2121 = vmatprep.subr.mxu0 0.0
        %2122 = vmatpush1.msra.mxu0 0.0
        %2123 = vmatprep.subr.mxu0 0.0
        %2124 = vmatpush1.msra.mxu0 0.0
        %2125 = vmatprep.subr.mxu0 0.0
        %2126 = vmatpush1.msra.mxu0 0.0
        %2127 = vmatprep.subr.mxu0 0.0
        %2128 = vmatpush1.msra.mxu0 0.0
        %2129 = vmatprep.subr.mxu0 0.0
        %2130 = vmatpush1.msra.mxu0 0.0
        %2131 = vmatprep.subr.mxu0 0.0
        %2132 = vmatpush1.msra.mxu0 0.0
        %2133 = vmatprep.subr.mxu0 0.0
        %2134 = vmatpush1.msra.mxu0 0.0
        %2135 = vmatprep.subr.mxu0 0.0
        %2136 = vmatpush1.msra.mxu0 0.0
        %2137 = vmatprep.subr.mxu0 0.0
        %2138 = vmatpush1.msra.mxu0 0.0
        %2139 = vmatprep.subr.mxu0 0.0
        %2140 = vmatpush1.msra.mxu0 0.0
        %2141 = vmatprep.subr.mxu0 0.0
        %2142 = vmatpush1.msra.mxu0 0.0
        %2143 = vmatprep.subr.mxu0 0.0
        %2144 = vmatpush1.msra.mxu0 0.0
        %2145 = vmatprep.subr.mxu0 0.0
        %2146 = vmatpush1.msra.mxu0 0.0
        %2147 = vmatprep.subr.mxu0 0.0
        %2148 = vmatpush1.msra.mxu0 0.0
        %2149 = vmatprep.subr.mxu0 0.0
        %2150 = vmatpush1.msra.mxu0 0.0
        %2151 = vmatprep.subr.mxu0 0.0
        %2152 = vmatpush1.msra.mxu0 0.0
        %2153 = vmatprep.subr.mxu0 0.0
        %2154 = vmatpush1.msra.mxu0 0.0
        %2155 = vmatprep.subr.mxu0 0.0
        %2156 = vmatpush1.msra.mxu0 0.0
        %2157 = vmatprep.subr.mxu0 0.0
        %2158 = vmatpush1.msra.mxu0 0.0
        %2159 = vmatprep.subr.mxu0 0.0
        %2160 = vmatpush1.msra.mxu0 0.0
        %2161 = vmatprep.subr.mxu0 0.0
        %2162 = vmatpush1.msra.mxu0 0.0
        %2163 = vmatprep.subr.mxu0 0.0
        %2164 = vmatpush1.msra.mxu0 0.0
        %2165 = vmatprep.subr.mxu0 0.0
        %2166 = vmatpush1.msra.mxu0 0.0
        %2167 = vmatprep.subr.mxu0 0.0
        %2168 = vmatpush1.msra.mxu0 0.0
        %2169 = vmatprep.subr.mxu0 0.0
        %2170 = vmatpush1.msra.mxu0 0.0
        %2171 = vmatprep.subr.mxu0 0.0
        %2172 = vmatpush1.msra.mxu0 0.0
        %2173 = vmatprep.subr.mxu0 0.0
        %2174 = vmatpush1.msra.mxu0 0.0
        %2175 = vmatprep.subr.mxu0 0.0
        %2176 = vmatpush1.msra.mxu0 0.0
        %2177 = vmatprep.subr.mxu0 0.0
        %2178 = vmatpush1.msra.mxu0 0.0
        %2179 = vmatprep.subr.mxu0 0.0
        %2180 = vmatpush1.msra.mxu0 0.0
        %2181 = vmatprep.mubr.f32.mxu0 0.0
        %2182 = vmatmul.mubr.f32.gmra.mrb[0].mxu0 %v2112
        %v2183 = vpop.f32.mrb[0].mxu0
        %v2184 = vadd.f32 0.0, %v2183
        %v2185 = vpop.f32.mrb[0].mxu0
        %v2186 = vadd.f32 0.0, %v2185
        %2187 = vmatprep.mubr.f32.mxu0 0.0
        %2188 = vmatmul.mubr.f32.gmra.mrb[0].mxu0 %v2115
        %v2189 = vpop.f32.mrb[0].mxu0
        %v2190 = vadd.f32 0.0, %v2189
        %v2191 = vpop.f32.mrb[0].mxu0
        %v2192 = vadd.f32 0.0, %v2191
        %2193 = vdwg.mxu0
        %2194 = vmatprep.subr.mxu0 0.0
        %2195 = vmatpush1.msra.mxu0 %v2094
        %2196 = vmatprep.subr.mxu0 0.0
        %2197 = vmatpush1.msra.mxu0 %v2100
        %2198 = vmatprep.subr.mxu0 0.0
        %2199 = vmatpush1.msra.mxu0 0.0
        %2200 = vmatprep.subr.mxu0 0.0
        %2201 = vmatpush1.msra.mxu0 0.0
        %2202 = vmatprep.subr.mxu0 0.0
        %2203 = vmatpush1.msra.mxu0 0.0
        %2204 = vmatprep.subr.mxu0 0.0
        %2205 = vmatpush1.msra.mxu0 0.0
        %2206 = vmatprep.subr.mxu0 0.0
        %2207 = vmatpush1.msra.mxu0 0.0
        %2208 = vmatprep.subr.mxu0 0.0
        %2209 = vmatpush1.msra.mxu0 0.0
        %2210 = vmatprep.subr.mxu0 0.0
        %2211 = vmatpush1.msra.mxu0 0.0
        %2212 = vmatprep.subr.mxu0 0.0
        %2213 = vmatpush1.msra.mxu0 0.0
        %2214 = vmatprep.subr.mxu0 0.0
        %2215 = vmatpush1.msra.mxu0 0.0
        %2216 = vmatprep.subr.mxu0 0.0
        %2217 = vmatpush1.msra.mxu0 0.0
        %2218 = vmatprep.subr.mxu0 0.0
        %2219 = vmatpush1.msra.mxu0 0.0
        %2220 = vmatprep.subr.mxu0 0.0
        %2221 = vmatpush1.msra.mxu0 0.0
        %2222 = vmatprep.subr.mxu0 0.0
        %2223 = vmatpush1.msra.mxu0 0.0
        %2224 = vmatprep.subr.mxu0 0.0
        %2225 = vmatpush1.msra.mxu0 0.0
        %2226 = vmatprep.subr.mxu0 0.0
        %2227 = vmatpush1.msra.mxu0 0.0
        %2228 = vmatprep.subr.mxu0 0.0
        %2229 = vmatpush1.msra.mxu0 0.0
        %2230 = vmatprep.subr.mxu0 0.0
        %2231 = vmatpush1.msra.mxu0 0.0
        %2232 = vmatprep.subr.mxu0 0.0
        %2233 = vmatpush1.msra.mxu0 0.0
        %2234 = vmatprep.subr.mxu0 0.0
        %2235 = vmatpush1.msra.mxu0 0.0
        %2236 = vmatprep.subr.mxu0 0.0
        %2237 = vmatpush1.msra.mxu0 0.0
        %2238 = vmatprep.subr.mxu0 0.0
        %2239 = vmatpush1.msra.mxu0 0.0
        %2240 = vmatprep.subr.mxu0 0.0
        %2241 = vmatpush1.msra.mxu0 0.0
        %2242 = vmatprep.subr.mxu0 0.0
        %2243 = vmatpush1.msra.mxu0 0.0
        %2244 = vmatprep.subr.mxu0 0.0
        %2245 = vmatpush1.msra.mxu0 0.0
        %2246 = vmatprep.subr.mxu0 0.0
        %2247 = vmatpush1.msra.mxu0 0.0
        %2248 = vmatprep.subr.mxu0 0.0
        %2249 = vmatpush1.msra.mxu0 0.0
        %2250 = vmatprep.subr.mxu0 0.0
        %2251 = vmatpush1.msra.mxu0 0.0
        %2252 = vmatprep.subr.mxu0 0.0
        %2253 = vmatpush1.msra.mxu0 0.0
        %2254 = vmatprep.subr.mxu0 0.0
        %2255 = vmatpush1.msra.mxu0 0.0
        %2256 = vmatprep.subr.mxu0 0.0
        %2257 = vmatpush1.msra.mxu0 0.0
        %2258 = vmatprep.mubr.f32.mxu0 0.0
        %2259 = vmatmul.mubr.f32.gmra.mrb[0].mxu0 %v2112
        %v2260 = vpop.f32.mrb[0].mxu0
        %v2261 = vadd.f32 0.0, %v2260
        %v2262 = vpop.f32.mrb[0].mxu0
        %2263 = vmatprep.mubr.f32.mxu0 0.0
        %2264 = vmatmul.mubr.f32.gmra.mrb[0].mxu0 %v2115
        %v2265 = vpop.f32.mrb[0].mxu0
        %v2266 = vadd.f32 0.0, %v2265
        %v2267 = vpop.f32.mrb[0].mxu0
        %2268 = vdwg.mxu0
        %v2269 = vadd.f32 %v2080, %v2184
        %v2270 = vadd.f32 %v2081, %v2186
        %v2271 = vadd.f32 %v2082, %v2261
        %v2272 = vadd.f32 %v2083, %v2190
        %v2273 = vadd.f32 %v2084, %v2192
        %v2274 = vadd.f32 %v2085, %v2266
        %s2275 = scalar_lea.vmem [#allocation6], 128
        %v2276 = vld [vmem:[%s2275] sm:$0xff]
        %v2277 = vld [vmem:[%s2275 + $0x8] sm:$0xff]
        %2278 = vrot.lane.b32.xlu0 %v785, 90
        %v2279 = vpop.permute.xlu0 %2278
        %2280 = vrot.lane.b32.xlu0 %v786, 90
        %v2281 = vpop.permute.xlu0 %2280
        %2282 = vrot.lane.b32.xlu0 %v787, 90
        %v2283 = vpop.permute.xlu0 %2282
        %2284 = vrot.lane.b32.xlu0 %v788, 90
        %v2285 = vpop.permute.xlu0 %2284
        %2286 = vrot.lane.b32.xlu0 %v789, 90
        %v2287 = vpop.permute.xlu0 %2286
        %2288 = vrot.lane.b32.xlu0 %v790, 90
        %v2289 = vpop.permute.xlu0 %2288
        %v2290 = vsel %vm683, %v2279, %v2281
        %v2291 = vsel %vm683, %v2281, %v2283
        %v2292 = vsel %vm683, %v2285, %v2287
        %v2293 = vsel %vm683, %v2287, %v2289
        %v2301 = vsel %vm824, %v2276, 0
        %v2304 = vsel %vm824, %v2277, 0
        %2306 = vmatprep.subr.mxu0 %v2291
        %2307 = vmatpush1.msra.mxu0 %v2290
        %2308 = vmatprep.subr.mxu0 %v2293
        %2309 = vmatpush1.msra.mxu0 %v2292
        %2310 = vmatprep.subr.mxu0 0.0
        %2311 = vmatpush1.msra.mxu0 0.0
        %2312 = vmatprep.subr.mxu0 0.0
        %2313 = vmatpush1.msra.mxu0 0.0
        %2314 = vmatprep.subr.mxu0 0.0
        %2315 = vmatpush1.msra.mxu0 0.0
        %2316 = vmatprep.subr.mxu0 0.0
        %2317 = vmatpush1.msra.mxu0 0.0
        %2318 = vmatprep.subr.mxu0 0.0
        %2319 = vmatpush1.msra.mxu0 0.0
        %2320 = vmatprep.subr.mxu0 0.0
        %2321 = vmatpush1.msra.mxu0 0.0
        %2322 = vmatprep.subr.mxu0 0.0
        %2323 = vmatpush1.msra.mxu0 0.0
        %2324 = vmatprep.subr.mxu0 0.0
        %2325 = vmatpush1.msra.mxu0 0.0
        %2326 = vmatprep.subr.mxu0 0.0
        %2327 = vmatpush1.msra.mxu0 0.0
        %2328 = vmatprep.subr.mxu0 0.0
        %2329 = vmatpush1.msra.mxu0 0.0
        %2330 = vmatprep.subr.mxu0 0.0
        %2331 = vmatpush1.msra.mxu0 0.0
        %2332 = vmatprep.subr.mxu0 0.0
        %2333 = vmatpush1.msra.mxu0 0.0
        %2334 = vmatprep.subr.mxu0 0.0
        %2335 = vmatpush1.msra.mxu0 0.0
        %2336 = vmatprep.subr.mxu0 0.0
        %2337 = vmatpush1.msra.mxu0 0.0
        %2338 = vmatprep.subr.mxu0 0.0
        %2339 = vmatpush1.msra.mxu0 0.0
        %2340 = vmatprep.subr.mxu0 0.0
        %2341 = vmatpush1.msra.mxu0 0.0
        %2342 = vmatprep.subr.mxu0 0.0
        %2343 = vmatpush1.msra.mxu0 0.0
        %2344 = vmatprep.subr.mxu0 0.0
        %2345 = vmatpush1.msra.mxu0 0.0
        %2346 = vmatprep.subr.mxu0 0.0
        %2347 = vmatpush1.msra.mxu0 0.0
        %2348 = vmatprep.subr.mxu0 0.0
        %2349 = vmatpush1.msra.mxu0 0.0
        %2350 = vmatprep.subr.mxu0 0.0
        %2351 = vmatpush1.msra.mxu0 0.0
        %2352 = vmatprep.subr.mxu0 0.0
        %2353 = vmatpush1.msra.mxu0 0.0
        %2354 = vmatprep.subr.mxu0 0.0
        %2355 = vmatpush1.msra.mxu0 0.0
        %2356 = vmatprep.subr.mxu0 0.0
        %2357 = vmatpush1.msra.mxu0 0.0
        %2358 = vmatprep.subr.mxu0 0.0
        %2359 = vmatpush1.msra.mxu0 0.0
        %2360 = vmatprep.subr.mxu0 0.0
        %2361 = vmatpush1.msra.mxu0 0.0
        %2362 = vmatprep.subr.mxu0 0.0
        %2363 = vmatpush1.msra.mxu0 0.0
        %2364 = vmatprep.subr.mxu0 0.0
        %2365 = vmatpush1.msra.mxu0 0.0
        %2366 = vmatprep.subr.mxu0 0.0
        %2367 = vmatpush1.msra.mxu0 0.0
        %2368 = vmatprep.subr.mxu0 0.0
        %2369 = vmatpush1.msra.mxu0 0.0
        %2370 = vmatprep.mubr.f32.mxu0 0.0
        %2371 = vmatmul.mubr.f32.gmra.mrb[0].mxu0 %v2301
        %v2372 = vpop.f32.mrb[0].mxu0
        %v2373 = vadd.f32 0.0, %v2372
        %v2374 = vpop.f32.mrb[0].mxu0
        %v2375 = vadd.f32 0.0, %v2374
        %2376 = vmatprep.mubr.f32.mxu0 0.0
        %2377 = vmatmul.mubr.f32.gmra.mrb[0].mxu0 %v2304
        %v2378 = vpop.f32.mrb[0].mxu0
        %v2379 = vadd.f32 0.0, %v2378
        %v2380 = vpop.f32.mrb[0].mxu0
        %v2381 = vadd.f32 0.0, %v2380
        %2382 = vdwg.mxu0
        %2383 = vmatprep.subr.mxu0 0.0
        %2384 = vmatpush1.msra.mxu0 %v2283
        %2385 = vmatprep.subr.mxu0 0.0
        %2386 = vmatpush1.msra.mxu0 %v2289
        %2387 = vmatprep.subr.mxu0 0.0
        %2388 = vmatpush1.msra.mxu0 0.0
        %2389 = vmatprep.subr.mxu0 0.0
        %2390 = vmatpush1.msra.mxu0 0.0
        %2391 = vmatprep.subr.mxu0 0.0
        %2392 = vmatpush1.msra.mxu0 0.0
        %2393 = vmatprep.subr.mxu0 0.0
        %2394 = vmatpush1.msra.mxu0 0.0
        %2395 = vmatprep.subr.mxu0 0.0
        %2396 = vmatpush1.msra.mxu0 0.0
        %2397 = vmatprep.subr.mxu0 0.0
        %2398 = vmatpush1.msra.mxu0 0.0
        %2399 = vmatprep.subr.mxu0 0.0
        %2400 = vmatpush1.msra.mxu0 0.0
        %2401 = vmatprep.subr.mxu0 0.0
        %2402 = vmatpush1.msra.mxu0 0.0
        %2403 = vmatprep.subr.mxu0 0.0
        %2404 = vmatpush1.msra.mxu0 0.0
        %2405 = vmatprep.subr.mxu0 0.0
        %2406 = vmatpush1.msra.mxu0 0.0
        %2407 = vmatprep.subr.mxu0 0.0
        %2408 = vmatpush1.msra.mxu0 0.0
        %2409 = vmatprep.subr.mxu0 0.0
        %2410 = vmatpush1.msra.mxu0 0.0
        %2411 = vmatprep.subr.mxu0 0.0
        %2412 = vmatpush1.msra.mxu0 0.0
        %2413 = vmatprep.subr.mxu0 0.0
        %2414 = vmatpush1.msra.mxu0 0.0
        %2415 = vmatprep.subr.mxu0 0.0
        %2416 = vmatpush1.msra.mxu0 0.0
        %2417 = vmatprep.subr.mxu0 0.0
        %2418 = vmatpush1.msra.mxu0 0.0
        %2419 = vmatprep.subr.mxu0 0.0
        %2420 = vmatpush1.msra.mxu0 0.0
        %2421 = vmatprep.subr.mxu0 0.0
        %2422 = vmatpush1.msra.mxu0 0.0
        %2423 = vmatprep.subr.mxu0 0.0
        %2424 = vmatpush1.msra.mxu0 0.0
        %2425 = vmatprep.subr.mxu0 0.0
        %2426 = vmatpush1.msra.mxu0 0.0
        %2427 = vmatprep.subr.mxu0 0.0
        %2428 = vmatpush1.msra.mxu0 0.0
        %2429 = vmatprep.subr.mxu0 0.0
        %2430 = vmatpush1.msra.mxu0 0.0
        %2431 = vmatprep.subr.mxu0 0.0
        %2432 = vmatpush1.msra.mxu0 0.0
        %2433 = vmatprep.subr.mxu0 0.0
        %2434 = vmatpush1.msra.mxu0 0.0
        %2435 = vmatprep.subr.mxu0 0.0
        %2436 = vmatpush1.msra.mxu0 0.0
        %2437 = vmatprep.subr.mxu0 0.0
        %2438 = vmatpush1.msra.mxu0 0.0
        %2439 = vmatprep.subr.mxu0 0.0
        %2440 = vmatpush1.msra.mxu0 0.0
        %2441 = vmatprep.subr.mxu0 0.0
        %2442 = vmatpush1.msra.mxu0 0.0
        %2443 = vmatprep.subr.mxu0 0.0
        %2444 = vmatpush1.msra.mxu0 0.0
        %2445 = vmatprep.subr.mxu0 0.0
        %2446 = vmatpush1.msra.mxu0 0.0
        %2447 = vmatprep.mubr.f32.mxu0 0.0
        %2448 = vmatmul.mubr.f32.gmra.mrb[0].mxu0 %v2301
        %v2449 = vpop.f32.mrb[0].mxu0
        %v2450 = vadd.f32 0.0, %v2449
        %v2451 = vpop.f32.mrb[0].mxu0
        %2452 = vmatprep.mubr.f32.mxu0 0.0
        %2453 = vmatmul.mubr.f32.gmra.mrb[0].mxu0 %v2304
        %v2454 = vpop.f32.mrb[0].mxu0
        %v2455 = vadd.f32 0.0, %v2454
        %v2456 = vpop.f32.mrb[0].mxu0
        %2457 = vdwg.mxu0
        %v2458 = vadd.f32 %v2269, %v2373
        %v2459 = vadd.f32 %v2270, %v2375
        %v2460 = vadd.f32 %v2271, %v2450
        %v2461 = vadd.f32 %v2272, %v2379
        %v2462 = vadd.f32 %v2273, %v2381
        %v2463 = vadd.f32 %v2274, %v2455
        %v2464 = vld [vmem:[%s3] sm:$0xff]
        %v2465 = vld [vmem:[%s3 + $0x8] sm:$0xff]
        %2467 = vset.pattern.permute.xlu0 0
        %2468 = vperm.xlu0 %2467, %v2464
        %v2469 = vpop.permute.xlu0 %2468
        %2472 = vset.pattern.permute.xlu0 0
        %2473 = vperm.xlu0 %2472, %v2465
        %v2474 = vpop.permute.xlu0 %2473
        %v2476 = vadd.f32 %v2458, %v2469
        %v2477 = vadd.f32 %v2459, %v2469
        %v2478 = vadd.f32 %v2460, %v2469
        %v2479 = vadd.f32 %v2461, %v2474
        %v2480 = vadd.f32 %v2462, %v2474
        %v2481 = vadd.f32 %v2463, %v2474
        %2488 = vrot.lane.b32.xlu0 %v278, 109
        %v2489 = vpop.permute.xlu0 %2488
        %2490 = vrot.lane.b32.xlu0 %v279, 109
        %v2491 = vpop.permute.xlu0 %2490
        %2492 = vrot.lane.b32.xlu0 %v280, 109
        %v2493 = vpop.permute.xlu0 %2492
        %2494 = vrot.lane.b32.xlu0 %v281, 109
        %v2495 = vpop.permute.xlu0 %2494
        %2496 = vrot.lane.b32.xlu0 %v282, 109
        %v2497 = vpop.permute.xlu0 %2496
        %2498 = vrot.lane.b32.xlu0 %v283, 109
        %v2499 = vpop.permute.xlu0 %2498
        %v2500 = vsel %vm487, %v2489, %v2491
        %v2501 = vsel %vm487, %v2491, %v2493
        %v2502 = vsel %vm487, %v2495, %v2497
        %v2503 = vsel %vm487, %v2497, %v2499
        %v2510 = vadd.f32 %v2476, %v2500
        %v2511 = vadd.f32 %v2477, %v2501
        %v2512 = vadd.f32 %v2478, %v2493
        %v2513 = vadd.f32 %v2479, %v2502
        %v2514 = vadd.f32 %v2480, %v2503
        %v2515 = vadd.f32 %v2481, %v2499
        %2516 = vst [vmem:[%s272] sm:$0xff] %v2510
        %2517 = vst [vmem:[%s272 + $0x8] sm:$0xff] %v2511
        %vm2518 = vcmask 244736
        %2519 = vst.msk [vmem:[%s272 + $0x10] sm:$0xff] %vm2518, %v2512
        %2520 = vst [vmem:[%s272 + $0x18] sm:$0xff] %v2513
        %2521 = vst [vmem:[%s272 + $0x20] sm:$0xff] %v2514
        %2522 = vst.msk [vmem:[%s272 + $0x28] sm:$0xff] %vm2518, %v2515
        %s2523 = sand.u32 %s146, 1
        %s2524 = scalar_lea.sflag [#allocation5], %s2523
        %s2525 = sand.u32 %s146, 1
        %s2526 = smul.addr %s2525, 48
        %s2527 = scalar_lea.vmem [#allocation8], %s2526
        // Predicated region
        $region49: #{tpu_custom_call.1} parent=39 // pred_check
          %p2528 = pneg %p156
        $region50: #{tpu_custom_call.1} parent=39 // pred_check_branch
          %2530 = sbr.rel (%p2528) target = $region52
        $region51: #{tpu_custom_call.1} parent=39 // pred_region
          %s2532 = ssub.s32 768, 768
          %2533 = vsyncadd %s2524, %s2532
          %s2534 = smul.addr %s23, 6
          %s2535 = smul.addr %s2534, 128
          %s2536 = scalar_lea.hbm %s5, %s2535
          %s2537 = sshll.u32 %s2527, 4
          %s2538 = int_to_ptr.vmem [resolvable:$true] %s2537
          %2543 = dma.vmem_to_hbm [thread:$0]  %s2538, 768, %s2536, %s2524, 384, 384, 24
        $region52: #{tpu_custom_call.1} parent=39 // pred_fallthru
          _
      $region40: #{tpu_custom_call.1} parent=5 // pred_fallthru
        _
      %p2544 = scmp.le.s32.totalorder 2, %s18
      // Predicated region
      $region53: #{tpu_custom_call.1} parent=5 // pred_check
        %p2545 = pneg %p2544
      $region54: #{tpu_custom_call.1} parent=5 // pred_check_branch
        %2547 = sbr.rel (%p2545) target = $region56
      $region55: #{tpu_custom_call.1} parent=5 // pred_region
        %s2548 = ssub.s32 %s18, 2
        // Predicated region
        $region57: #{tpu_custom_call.1} parent=55 // pred_check
          %p2549 = pneg %p162
        $region58: #{tpu_custom_call.1} parent=55 // pred_check_branch
          %2551 = sbr.rel (%p2549) target = $region60
        $region59: #{tpu_custom_call.1} parent=55 // pred_region
          %s2552 = sand.u32 %s147, 1
          %s2553 = scalar_lea.sflag [#allocation5], %s2552
          %s2554 = sand.u32 %s147, 1
          %s2555 = smul.addr %s2554, 48
          %s2556 = scalar_lea.vmem [#allocation8], %s2555
          %2557 = dma.done %s2553, 768
        $region60: #{tpu_custom_call.1} parent=55 // pred_fallthru
          _
      $region56: #{tpu_custom_call.1} parent=5 // pred_fallthru
        _
    $region6: #{tpu_custom_call.1} parent=1 // loop_footer
      %s22 = sadd.s32 1, %s18
    $region7: #{tpu_custom_call.1} parent=1 // loop_footer_branch
      %17 = sbr.rel target = $region3
    $region8: #{tpu_custom_call.1} parent=1 // loop_exit
      _
    %2558 = vsyncpa [#allocation4], 1
    %s2559 = scalar_lea.sflag [#allocation4], 1
    %2560 = vsyncpa %s2559, 1
    %2561 = vsyncpa [#allocation7], 1
    %2562 = vsyncpa [#allocation5], 1
    %s2563 = scalar_lea.sflag [#allocation5], 1
    %2564 = vsyncpa %s2563, 1

</llo_original>
